<compile_context>
chip_gen: v7x
topology: tpu7x:2x2x1
jax: 0.10.0
libtpu: 0.0.40
codegen_flags: <defaults>
</compile_context>

<pallas_src>
import functools

import jax
import jax.numpy as jnp
from jax.experimental import pallas as pl
from jax.experimental.pallas import tpu as pltpu

LANE = 128
SUBLANE = 8


def _round_up(x, m):
    return (x + m - 1) // m * m


def _physical_vmem_bytes():
    try:
        return int(pltpu.get_tpu_info().vmem_capacity_bytes)
    except Exception:
        return 64 << 20  # v7x per-TensorCore capacity: the safe lower bound


def _choose_batch_tile(B):
    """>=2 grid steps when B>8 (v7x megacore), <=512 rows/tile, minimal padding."""
    b8 = _round_up(max(B, 1), SUBLANE)
    if b8 <= SUBLANE:
        return SUBLANE                       # tiny batch: latency-bound anyway
    n_tiles = max(2, pl.cdiv(b8, 512))
    return _round_up(pl.cdiv(b8, n_tiles), SUBLANE)


# ----------------------------- fused Pallas kernel ---------------------------
def _fused_mlp_kernel(*refs, relu_flags):
    """refs = (xA, xB, wA0, wB0, b0, w1, b1, ..., out_ref).

    Layer 0 is split into two K-partial dots (one per drug branch) whose
    outputs land in disjoint lane ranges, so the torch.cat is free.  All dots
    run with bf16 operands on the MXU, f32 accumulation, and an f32 bias+ReLU
    epilogue; zero-padded lanes stay exactly zero through every layer.
    """
    xA_ref, xB_ref = refs[0], refs[1]
    out_ref = refs[-1]
    wA0, wB0, b0 = refs[2][...], refs[3][...], refs[4][...]

    y = (jnp.dot(xA_ref[...].astype(wA0.dtype), wA0,
                 preferred_element_type=jnp.float32)
         + jnp.dot(xB_ref[...].astype(wB0.dtype), wB0,
                   preferred_element_type=jnp.float32)
         + b0)
    if relu_flags[0]:
        y = jnp.maximum(y, 0.0)
    x = y
    for i, relu in enumerate(relu_flags[1:]):
        w = refs[5 + 2 * i][...]
        b = refs[6 + 2 * i][...]
        y = jnp.dot(x.astype(w.dtype), w, preferred_element_type=jnp.float32) + b
        if relu:
            y = jnp.maximum(y, 0.0)
        x = y
    out_ref[...] = x.astype(out_ref.dtype)


def fused_mlp(xA, xB, first, rest, relu_flags, *, out_dtype=jnp.float32):
    """xA: (B, k1), xB: (B, k2) raw branch inputs.
    first = (wA0, wB0, b0) bf16/bf16/f32 padded first-layer weights.
    rest  = [(W_pad, b_pad), ...] bf16/f32 padded merged layers (incl. head)."""
    B, k1 = xA.shape
    _, k2 = xB.shape
    wA0, wB0, b0 = first
    n_out = rest[-1][0].shape[1] if rest else wA0.shape[1]

    batch_tile = _choose_batch_tile(B)
    b_pad = _round_up(B, batch_tile)
    if b_pad != B:
        # TODO(synk): mask the ragged tail tile in-kernel instead of padding rows.
        xA = jnp.pad(xA, ((0, b_pad - B), (0, 0)))
        xB = jnp.pad(xB, ((0, b_pad - B), (0, 0)))
    grid = (b_pad // batch_tile,)

    weight_arrays = [wA0, wB0, b0] + [a for wb in rest for a in wb]
    weight_bytes = sum(int(a.size) * a.dtype.itemsize for a in weight_arrays)
    widest_n = max(w.shape[1] for w in [wA0] + [w for w, _ in rest])
    out_itemsize = jnp.dtype(out_dtype).itemsize

    # Explicit VMEM budget: resident (single-buffered) weights + double-buffered
    # input/output tiles + live f32/bf16 activation temporaries, 2x headroom.
    vmem_need = (weight_bytes
                 + 2 * batch_tile * (k1 + k2) * xA.dtype.itemsize
                 + 2 * batch_tile * n_out * out_itemsize
                 + 2 * batch_tile * widest_n * (4 + 2))
    vmem_limit = int(min(max(2 * vmem_need + (4 << 20), 32 << 20),
                         (_physical_vmem_bytes() * 3) // 4))

    flops = 2 * b_pad * sum(int(w.shape[0]) * int(w.shape[1])
                            for w in [wA0, wB0] + [w for w, _ in rest])
    bytes_accessed = (int(xA.size) * xA.dtype.itemsize
                      + int(xB.size) * xB.dtype.itemsize
                      + weight_bytes + b_pad * n_out * out_itemsize)
    cost = pl.CostEstimate(flops=flops, transcendentals=0,
                           bytes_accessed=bytes_accessed)

    def run(single_buffer_weights):
        def wspec(shape):
            if single_buffer_weights:
                # Constant index_map + Buffered(1): weights are VMEM-resident
                # once, not double-buffered (matters under v7x's 64 MiB cap).
                return pl.BlockSpec(shape, lambda i: (0, 0),
                                    pipeline_mode=pl.Buffered(1))
            return pl.BlockSpec(shape, lambda i: (0, 0))

        in_specs = [pl.BlockSpec((batch_tile, k1), lambda i: (i, 0)),
                    pl.BlockSpec((batch_tile, k2), lambda i: (i, 0))]
        operands = [xA, xB]
        for arr in (wA0, wB0, b0):
            in_specs.append(wspec(arr.shape))
            operands.append(arr)
        for w, b in rest:
            in_specs.append(wspec(w.shape))
            operands.append(w)
            in_specs.append(wspec(b.shape))
            operands.append(b)

        return pl.pallas_call(
            functools.partial(_fused_mlp_kernel, relu_flags=relu_flags),
            out_shape=jax.ShapeDtypeStruct((b_pad, n_out), out_dtype),
            grid=grid,
            in_specs=in_specs,
            out_specs=pl.BlockSpec((batch_tile, n_out), lambda i: (i, 0)),
            compiler_params=pltpu.CompilerParams(
                dimension_semantics=("parallel",),
                vmem_limit_bytes=vmem_limit),
            cost_estimate=cost,
        )(*operands)

    try:
        out = run(True)
    except Exception:
        # Fallback for jax builds where pipeline_mode=pl.Buffered(1) is not
        # accepted on the top-level pallas_call pipeline; math is identical.
        out = run(False)
    return out[:B]


# --------------------------- parameter creation ------------------------------
def _init_linear(key, in_dim, out_dim, dtype=jnp.float32):
    """Deterministic init mimicking nn.Linear's uniform(-1/sqrt(in), 1/sqrt(in))."""
    kw, kb = jax.random.split(key)
    bound = 1.0 / jnp.sqrt(jnp.asarray(in_dim, dtype))
    w = jax.random.uniform(kw, (in_dim, out_dim), dtype, -bound, bound)
    b = jax.random.uniform(kb, (1, out_dim), dtype, -bound, bound)
    return w, b


def make_matchmaker_params(key, dsn1_layers, dsn2_layers, spn_layers,
                           input_shape1, input_shape2):
    params = {"dsn1": [], "dsn2": [], "spn": []}
    prev = input_shape1
    for size in dsn1_layers:
        key, sub = jax.random.split(key)
        params["dsn1"].append(_init_linear(sub, prev, size))
        prev = size
    prev = input_shape2
    for size in dsn2_layers:
        key, sub = jax.random.split(key)
        params["dsn2"].append(_init_linear(sub, prev, size))
        prev = size
    prev = dsn1_layers[-1] + dsn2_layers[-1]
    for size in spn_layers:
        key, sub = jax.random.split(key)
        params["spn"].append(_init_linear(sub, prev, size))
        prev = size
    key, sub = jax.random.split(key)
    params["output"] = _init_linear(sub, spn_layers[-1], 1)
    return params


# --------------------- fused / padded layer construction ---------------------
def build_fused_layers(params, *, weight_dtype=jnp.bfloat16,
                       bias_dtype=jnp.float32):
    """Fold the whole network into one padded bf16 matmul chain.

    Layer 0 is kept as two per-branch K-partial weights (wA0, wB0) so drugA /
    drugB feed the kernel directly (no wrapper-side concat).  Subsequent dsn
    layers are block-diagonal merges; branch-1 output occupies lanes [0:n1),
    branch-2 lanes [n1:n1+n2), so after the last dsn layer the activation IS
    the torch.cat((d1, d2), dim=1) layout.  All N dims are zero-padded to 128
    multiples; zero bias padding keeps padded lanes exactly zero through ReLU.
    """
    dsn1, dsn2, spn = params["dsn1"], params["dsn2"], params["spn"]
    # TODO(synk): block-diagonal merge assumes equal-depth dsn branches (true
    # for standard MatchMaker configs); unequal depths need a split chain.
    assert len(dsn1) == len(dsn2)
    n_dsn = len(dsn1)
    relu_flags = []

    # --- first fused layer: two K-partial weights, concatenated output lanes.
    w1, b1 = dsn1[0]
    w2, b2 = dsn2[0]
    k1, n1 = w1.shape
    k2, n2 = w2.shape
    n_pad = _round_up(n1 + n2, LANE)
    wA0 = jnp.zeros((k1, n_pad), weight_dtype).at[:, :n1].set(w1.astype(weight_dtype))
    wB0 = jnp.zeros((k2, n_pad), weight_dtype).at[:, n1:n1 + n2].set(w2.astype(weight_dtype))
    b0 = (jnp.zeros((1, n_pad), bias_dtype)
          .at[:, :n1].set(b1.astype(bias_dtype))
          .at[:, n1:n1 + n2].set(b2.astype(bias_dtype)))
    relu_flags.append(n_dsn > 1)            # ReLU on all but the last dsn layer
    first = (wA0, wB0, b0)

    prev_off2 = n1                          # lane where branch-2 features start
    prev_pad = n_pad
    rest = []

    # --- remaining dsn layers: block-diagonal merge.
    for i in range(1, n_dsn):
        w1, b1 = dsn1[i]
        w2, b2 = dsn2[i]
        k1i, n1i = w1.shape
        k2i, n2i = w2.shape
        n_pad = _round_up(n1i + n2i, LANE)
        w = jnp.zeros((prev_pad, n_pad), weight_dtype)
        w = w.at[0:k1i, 0:n1i].set(w1.astype(weight_dtype))
        w = w.at[prev_off2:prev_off2 + k2i, n1i:n1i + n2i].set(w2.astype(weight_dtype))
        bias = (jnp.zeros((1, n_pad), bias_dtype)
                .at[:, :n1i].set(b1.astype(bias_dtype))
                .at[:, n1i:n1i + n2i].set(b2.astype(bias_dtype)))
        rest.append((w, bias))
        relu_flags.append(i < n_dsn - 1)
        prev_off2 = n1i
        prev_pad = n_pad

    # --- spn stack + output head on the already-concatenated layout.
    tail = list(spn) + [params["output"]]
    for i, (w_raw, b_raw) in enumerate(tail):
        k, n = w_raw.shape
        n_pad = _round_up(n, LANE)          # head pads 1 -> exactly 128 lanes
        w = jnp.zeros((prev_pad, n_pad), weight_dtype).at[:k, :n].set(
            w_raw.astype(weight_dtype))
        bias = jnp.zeros((1, n_pad), bias_dtype).at[:, :n].set(
            b_raw.astype(bias_dtype))
        rest.append((w, bias))
        relu_flags.append(i < len(spn) - 1)  # ReLU on spn[:-1]; none on head
        prev_pad = n_pad

    return first, rest, tuple(relu_flags)


# ------------------------------ forward pass ---------------------------------
def matchmaker_forward(fused, drugA_cell, drugB_cell):
    first, rest, relu_flags = fused
    out = fused_mlp(drugA_cell, drugB_cell, first, rest, relu_flags)
    return out[:, :1]        # lanes 1..127 of the head block are exact zeros


# --------------------------- pure-JAX reference -------------------------------
def ref_forward(params, a, bx):
    n1 = len(params["dsn1"])
    for i, (w, b) in enumerate(params["dsn1"]):
        a = a @ w + b
        if i < n1 - 1:
            a = jnp.maximum(a, 0.0)
    n2 = len(params["dsn2"])
    for i, (w, b) in enumerate(params["dsn2"]):
        bx = bx @ w + b
        if i < n2 - 1:
            bx = jnp.maximum(bx, 0.0)
    x = jnp.concatenate([a, bx], axis=1)
    ns = len(params["spn"])
    for i, (w, b) in enumerate(params["spn"]):
        x = x @ w + b
        if i < ns - 1:
            x = jnp.maximum(x, 0.0)
    w, b = params["output"]
    return x @ w + b


# ---------------------------------- main --------------------------------------
if __name__ == "__main__":
    key = jax.random.PRNGKey(0)

    # Small synthetic config consistent with MatchMakerModel's constructor.
    batch = 8
    input_shape1 = 32
    input_shape2 = 32
    dsn1_layers = [64, 32]
    dsn2_layers = [64, 32]
    spn_layers = [64, 16]

    kp, ka, kb = jax.random.split(key, 3)
    params = make_matchmaker_params(kp, dsn1_layers, dsn2_layers, spn_layers,
                                    input_shape1, input_shape2)
    fused = build_fused_layers(params)

    drugA_cell = jax.random.normal(ka, (batch, input_shape1), jnp.float32)
    drugB_cell = jax.random.normal(kb, (batch, input_shape2), jnp.float32)

    out = matchmaker_forward(fused, drugA_cell, drugB_cell)
    out = jax.block_until_ready(out)
    assert out.shape == (batch, 1), out.shape

    ref = ref_forward(params, drugA_cell, drugB_cell)
    # bf16 MXU operands with f32 accumulation: loose-ish tolerance vs f32 ref.
    err = float(jnp.max(jnp.abs(out - ref)))
    assert jnp.allclose(out, ref, atol=5e-2, rtol=5e-2), err

    print("KERNEL_OK")
</pallas_src>

<mosaic_0001>
module attributes {stable_mosaic.version = 11 : i64} {
  func.func @_fused_mlp_kernel(%arg0: i32, %arg1: memref<8x32xf32, #tpu.memory_space<vmem>>, %arg2: memref<8x32xf32, #tpu.memory_space<vmem>>, %arg3: memref<32x128xbf16, #tpu.memory_space<vmem>>, %arg4: memref<32x128xbf16, #tpu.memory_space<vmem>>, %arg5: memref<1x128xf32, #tpu.memory_space<vmem>>, %arg6: memref<128x128xbf16, #tpu.memory_space<vmem>>, %arg7: memref<1x128xf32, #tpu.memory_space<vmem>>, %arg8: memref<128x128xbf16, #tpu.memory_space<vmem>>, %arg9: memref<1x128xf32, #tpu.memory_space<vmem>>, %arg10: memref<128x128xbf16, #tpu.memory_space<vmem>>, %arg11: memref<1x128xf32, #tpu.memory_space<vmem>>, %arg12: memref<128x128xbf16, #tpu.memory_space<vmem>>, %arg13: memref<1x128xf32, #tpu.memory_space<vmem>>, %arg14: memref<8x128xf32, #tpu.memory_space<vmem>>) attributes {dimension_semantics = [#tpu.dimension_semantics<parallel>], iteration_bounds = array<i64: 1>, scalar_prefetch = 0 : i64, scratch_operands = 0 : i64, tpu.core_type = #tpu.core_type<tc>, window_params = [{transform_indices = @transform_0, window_bounds = array<i64: 8, 32>}, {transform_indices = @transform_1, window_bounds = array<i64: 8, 32>}, {pipeline_mode = #tpu.pipeline_mode<synchronous>, transform_indices = @transform_2, window_bounds = array<i64: 32, 128>}, {pipeline_mode = #tpu.pipeline_mode<synchronous>, transform_indices = @transform_3, window_bounds = array<i64: 32, 128>}, {pipeline_mode = #tpu.pipeline_mode<synchronous>, transform_indices = @transform_4, window_bounds = array<i64: 1, 128>}, {pipeline_mode = #tpu.pipeline_mode<synchronous>, transform_indices = @transform_5, window_bounds = array<i64: 128, 128>}, {pipeline_mode = #tpu.pipeline_mode<synchronous>, transform_indices = @transform_6, window_bounds = array<i64: 1, 128>}, {pipeline_mode = #tpu.pipeline_mode<synchronous>, transform_indices = @transform_7, window_bounds = array<i64: 128, 128>}, {pipeline_mode = #tpu.pipeline_mode<synchronous>, transform_indices = @transform_8, window_bounds = array<i64: 1, 128>}, {pipeline_mode = #tpu.pipeline_mode<synchronous>, transform_indices = @transform_9, window_bounds = array<i64: 128, 128>}, {pipeline_mode = #tpu.pipeline_mode<synchronous>, transform_indices = @transform_10, window_bounds = array<i64: 1, 128>}, {pipeline_mode = #tpu.pipeline_mode<synchronous>, transform_indices = @transform_11, window_bounds = array<i64: 128, 128>}, {pipeline_mode = #tpu.pipeline_mode<synchronous>, transform_indices = @transform_12, window_bounds = array<i64: 1, 128>}, {transform_indices = @transform_13, window_bounds = array<i64: 8, 128>}]} {
    %c0 = arith.constant 0 : index
    %c0_0 = arith.constant 0 : index
    %0 = vector.load %arg3[%c0, %c0_0] : memref<32x128xbf16, #tpu.memory_space<vmem>>, vector<32x128xbf16>
    %c0_1 = arith.constant 0 : index
    %c0_2 = arith.constant 0 : index
    %1 = vector.load %arg4[%c0_1, %c0_2] : memref<32x128xbf16, #tpu.memory_space<vmem>>, vector<32x128xbf16>
    %c0_3 = arith.constant 0 : index
    %c0_4 = arith.constant 0 : index
    %2 = vector.load %arg5[%c0_3, %c0_4] : memref<1x128xf32, #tpu.memory_space<vmem>>, vector<1x128xf32>
    %c0_5 = arith.constant 0 : index
    %c0_6 = arith.constant 0 : index
    %3 = vector.load %arg1[%c0_5, %c0_6] : memref<8x32xf32, #tpu.memory_space<vmem>>, vector<8x32xf32>
    %4 = arith.truncf %3 : vector<8x32xf32> to vector<8x32xbf16>
    %cst = arith.constant dense<0.000000e+00> : vector<8x128xf32>
    %5 = tpu.matmul %4, %0, %cst {dimension_numbers = #tpu.dot_dimension_numbers<[1], [0], [0], [1], [0, 0, 1, 1], [], []>} : vector<8x32xbf16>, vector<32x128xbf16>, vector<8x128xf32> -> vector<8x128xf32>
    %c0_7 = arith.constant 0 : index
    %c0_8 = arith.constant 0 : index
    %6 = vector.load %arg2[%c0_7, %c0_8] : memref<8x32xf32, #tpu.memory_space<vmem>>, vector<8x32xf32>
    %7 = arith.truncf %6 : vector<8x32xf32> to vector<8x32xbf16>
    %cst_9 = arith.constant dense<0.000000e+00> : vector<8x128xf32>
    %8 = tpu.matmul %7, %1, %cst_9 {dimension_numbers = #tpu.dot_dimension_numbers<[1], [0], [0], [1], [0, 0, 1, 1], [], []>} : vector<8x32xbf16>, vector<32x128xbf16>, vector<8x128xf32> -> vector<8x128xf32>
    %9 = arith.addf %5, %8 : vector<8x128xf32>
    %10 = vector.broadcast %2 : vector<1x128xf32> to vector<8x128xf32>
    %11 = arith.addf %9, %10 : vector<8x128xf32>
    %cst_10 = arith.constant 0.000000e+00 : f32
    %12 = vector.broadcast %cst_10 : f32 to vector<8x128xf32>
    %13 = arith.maximumf %11, %12 : vector<8x128xf32>
    %c0_11 = arith.constant 0 : index
    %c0_12 = arith.constant 0 : index
    %14 = vector.load %arg6[%c0_11, %c0_12] : memref<128x128xbf16, #tpu.memory_space<vmem>>, vector<128x128xbf16>
    %c0_13 = arith.constant 0 : index
    %c0_14 = arith.constant 0 : index
    %15 = vector.load %arg7[%c0_13, %c0_14] : memref<1x128xf32, #tpu.memory_space<vmem>>, vector<1x128xf32>
    %16 = arith.truncf %13 : vector<8x128xf32> to vector<8x128xbf16>
    %cst_15 = arith.constant dense<0.000000e+00> : vector<8x128xf32>
    %17 = tpu.matmul %16, %14, %cst_15 {dimension_numbers = #tpu.dot_dimension_numbers<[1], [0], [0], [1], [0, 0, 1, 1], [], []>} : vector<8x128xbf16>, vector<128x128xbf16>, vector<8x128xf32> -> vector<8x128xf32>
    %18 = vector.broadcast %15 : vector<1x128xf32> to vector<8x128xf32>
    %19 = arith.addf %17, %18 : vector<8x128xf32>
    %c0_16 = arith.constant 0 : index
    %c0_17 = arith.constant 0 : index
    %20 = vector.load %arg8[%c0_16, %c0_17] : memref<128x128xbf16, #tpu.memory_space<vmem>>, vector<128x128xbf16>
    %c0_18 = arith.constant 0 : index
    %c0_19 = arith.constant 0 : index
    %21 = vector.load %arg9[%c0_18, %c0_19] : memref<1x128xf32, #tpu.memory_space<vmem>>, vector<1x128xf32>
    %22 = arith.truncf %19 : vector<8x128xf32> to vector<8x128xbf16>
    %cst_20 = arith.constant dense<0.000000e+00> : vector<8x128xf32>
    %23 = tpu.matmul %22, %20, %cst_20 {dimension_numbers = #tpu.dot_dimension_numbers<[1], [0], [0], [1], [0, 0, 1, 1], [], []>} : vector<8x128xbf16>, vector<128x128xbf16>, vector<8x128xf32> -> vector<8x128xf32>
    %24 = vector.broadcast %21 : vector<1x128xf32> to vector<8x128xf32>
    %25 = arith.addf %23, %24 : vector<8x128xf32>
    %cst_21 = arith.constant 0.000000e+00 : f32
    %26 = vector.broadcast %cst_21 : f32 to vector<8x128xf32>
    %27 = arith.maximumf %25, %26 : vector<8x128xf32>
    %c0_22 = arith.constant 0 : index
    %c0_23 = arith.constant 0 : index
    %28 = vector.load %arg10[%c0_22, %c0_23] : memref<128x128xbf16, #tpu.memory_space<vmem>>, vector<128x128xbf16>
    %c0_24 = arith.constant 0 : index
    %c0_25 = arith.constant 0 : index
    %29 = vector.load %arg11[%c0_24, %c0_25] : memref<1x128xf32, #tpu.memory_space<vmem>>, vector<1x128xf32>
    %30 = arith.truncf %27 : vector<8x128xf32> to vector<8x128xbf16>
    %cst_26 = arith.constant dense<0.000000e+00> : vector<8x128xf32>
    %31 = tpu.matmul %30, %28, %cst_26 {dimension_numbers = #tpu.dot_dimension_numbers<[1], [0], [0], [1], [0, 0, 1, 1], [], []>} : vector<8x128xbf16>, vector<128x128xbf16>, vector<8x128xf32> -> vector<8x128xf32>
    %32 = vector.broadcast %29 : vector<1x128xf32> to vector<8x128xf32>
    %33 = arith.addf %31, %32 : vector<8x128xf32>
    %c0_27 = arith.constant 0 : index
    %c0_28 = arith.constant 0 : index
    %34 = vector.load %arg12[%c0_27, %c0_28] : memref<128x128xbf16, #tpu.memory_space<vmem>>, vector<128x128xbf16>
    %c0_29 = arith.constant 0 : index
    %c0_30 = arith.constant 0 : index
    %35 = vector.load %arg13[%c0_29, %c0_30] : memref<1x128xf32, #tpu.memory_space<vmem>>, vector<1x128xf32>
    %36 = arith.truncf %33 : vector<8x128xf32> to vector<8x128xbf16>
    %cst_31 = arith.constant dense<0.000000e+00> : vector<8x128xf32>
    %37 = tpu.matmul %36, %34, %cst_31 {dimension_numbers = #tpu.dot_dimension_numbers<[1], [0], [0], [1], [0, 0, 1, 1], [], []>} : vector<8x128xbf16>, vector<128x128xbf16>, vector<8x128xf32> -> vector<8x128xf32>
    %38 = vector.broadcast %35 : vector<1x128xf32> to vector<8x128xf32>
    %39 = arith.addf %37, %38 : vector<8x128xf32>
    %c0_32 = arith.constant 0 : index
    %c0_33 = arith.constant 0 : index
    %40 = vector.load %arg14[%c0_32, %c0_33] : memref<8x128xf32, #tpu.memory_space<vmem>>, vector<8x128xf32>
    tpu.vector_store %arg14[%c0_32, %c0_33], %39 {strides = array<i32>} : memref<8x128xf32, #tpu.memory_space<vmem>>, vector<8x128xf32>,
    return
  }
  func.func @transform_0(%arg0: i32) -> (i32, i32) {
    %c0_i32 = arith.constant 0 : i32
    %c0_i32_0 = arith.constant 0 : i32
    return %arg0, %c0_i32 : i32, i32
  }
  func.func @transform_1(%arg0: i32) -> (i32, i32) {
    %c0_i32 = arith.constant 0 : i32
    %c0_i32_0 = arith.constant 0 : i32
    return %arg0, %c0_i32 : i32, i32
  }
  func.func @transform_2(%arg0: i32) -> (i32, i32) {
    %c0_i32 = arith.constant 0 : i32
    %c0_i32_0 = arith.constant 0 : i32
    %c0_i32_1 = arith.constant 0 : i32
    return %c0_i32, %c0_i32_0 : i32, i32
  }
  func.func @transform_3(%arg0: i32) -> (i32, i32) {
    %c0_i32 = arith.constant 0 : i32
    %c0_i32_0 = arith.constant 0 : i32
    %c0_i32_1 = arith.constant 0 : i32
    return %c0_i32, %c0_i32_0 : i32, i32
  }
  func.func @transform_4(%arg0: i32) -> (i32, i32) {
    %c0_i32 = arith.constant 0 : i32
    %c0_i32_0 = arith.constant 0 : i32
    %c0_i32_1 = arith.constant 0 : i32
    return %c0_i32, %c0_i32_0 : i32, i32
  }
  func.func @transform_5(%arg0: i32) -> (i32, i32) {
    %c0_i32 = arith.constant 0 : i32
    %c0_i32_0 = arith.constant 0 : i32
    %c0_i32_1 = arith.constant 0 : i32
    return %c0_i32, %c0_i32_0 : i32, i32
  }
  func.func @transform_6(%arg0: i32) -> (i32, i32) {
    %c0_i32 = arith.constant 0 : i32
    %c0_i32_0 = arith.constant 0 : i32
    %c0_i32_1 = arith.constant 0 : i32
    return %c0_i32, %c0_i32_0 : i32, i32
  }
  func.func @transform_7(%arg0: i32) -> (i32, i32) {
    %c0_i32 = arith.constant 0 : i32
    %c0_i32_0 = arith.constant 0 : i32
    %c0_i32_1 = arith.constant 0 : i32
    return %c0_i32, %c0_i32_0 : i32, i32
  }
  func.func @transform_8(%arg0: i32) -> (i32, i32) {
    %c0_i32 = arith.constant 0 : i32
    %c0_i32_0 = arith.constant 0 : i32
    %c0_i32_1 = arith.constant 0 : i32
    return %c0_i32, %c0_i32_0 : i32, i32
  }
  func.func @transform_9(%arg0: i32) -> (i32, i32) {
    %c0_i32 = arith.constant 0 : i32
    %c0_i32_0 = arith.constant 0 : i32
    %c0_i32_1 = arith.constant 0 : i32
    return %c0_i32, %c0_i32_0 : i32, i32
  }
  func.func @transform_10(%arg0: i32) -> (i32, i32) {
    %c0_i32 = arith.constant 0 : i32
    %c0_i32_0 = arith.constant 0 : i32
    %c0_i32_1 = arith.constant 0 : i32
    return %c0_i32, %c0_i32_0 : i32, i32
  }
  func.func @transform_11(%arg0: i32) -> (i32, i32) {
    %c0_i32 = arith.constant 0 : i32
    %c0_i32_0 = arith.constant 0 : i32
    %c0_i32_1 = arith.constant 0 : i32
    return %c0_i32, %c0_i32_0 : i32, i32
  }
  func.func @transform_12(%arg0: i32) -> (i32, i32) {
    %c0_i32 = arith.constant 0 : i32
    %c0_i32_0 = arith.constant 0 : i32
    %c0_i32_1 = arith.constant 0 : i32
    return %c0_i32, %c0_i32_0 : i32, i32
  }
  func.func @transform_13(%arg0: i32) -> (i32, i32) {
    %c0_i32 = arith.constant 0 : i32
    %c0_i32_0 = arith.constant 0 : i32
    return %arg0, %c0_i32 : i32, i32
  }
}

module attributes {stable_mosaic.version = 11 : i64} {
  func.func @_fused_mlp_kernel(%arg0: i32, %arg1: memref<8x32xf32, #tpu.memory_space<vmem>>, %arg2: memref<8x32xf32, #tpu.memory_space<vmem>>, %arg3: memref<32x128xbf16, #tpu.memory_space<vmem>>, %arg4: memref<32x128xbf16, #tpu.memory_space<vmem>>, %arg5: memref<1x128xf32, #tpu.memory_space<vmem>>, %arg6: memref<128x128xbf16, #tpu.memory_space<vmem>>, %arg7: memref<1x128xf32, #tpu.memory_space<vmem>>, %arg8: memref<128x128xbf16, #tpu.memory_space<vmem>>, %arg9: memref<1x128xf32, #tpu.memory_space<vmem>>, %arg10: memref<128x128xbf16, #tpu.memory_space<vmem>>, %arg11: memref<1x128xf32, #tpu.memory_space<vmem>>, %arg12: memref<128x128xbf16, #tpu.memory_space<vmem>>, %arg13: memref<1x128xf32, #tpu.memory_space<vmem>>, %arg14: memref<8x128xf32, #tpu.memory_space<vmem>>) attributes {dimension_semantics = [#tpu.dimension_semantics<parallel>], iteration_bounds = array<i64: 1>, scalar_prefetch = 0 : i64, scratch_operands = 0 : i64, tpu.core_type = #tpu.core_type<tc>, window_params = [{transform_indices = @transform_0, window_bounds = array<i64: 8, 32>}, {transform_indices = @transform_1, window_bounds = array<i64: 8, 32>}, {pipeline_mode = #tpu.pipeline_mode<synchronous>, transform_indices = @transform_2, window_bounds = array<i64: 32, 128>}, {pipeline_mode = #tpu.pipeline_mode<synchronous>, transform_indices = @transform_3, window_bounds = array<i64: 32, 128>}, {pipeline_mode = #tpu.pipeline_mode<synchronous>, transform_indices = @transform_4, window_bounds = array<i64: 1, 128>}, {pipeline_mode = #tpu.pipeline_mode<synchronous>, transform_indices = @transform_5, window_bounds = array<i64: 128, 128>}, {pipeline_mode = #tpu.pipeline_mode<synchronous>, transform_indices = @transform_6, window_bounds = array<i64: 1, 128>}, {pipeline_mode = #tpu.pipeline_mode<synchronous>, transform_indices = @transform_7, window_bounds = array<i64: 128, 128>}, {pipeline_mode = #tpu.pipeline_mode<synchronous>, transform_indices = @transform_8, window_bounds = array<i64: 1, 128>}, {pipeline_mode = #tpu.pipeline_mode<synchronous>, transform_indices = @transform_9, window_bounds = array<i64: 128, 128>}, {pipeline_mode = #tpu.pipeline_mode<synchronous>, transform_indices = @transform_10, window_bounds = array<i64: 1, 128>}, {pipeline_mode = #tpu.pipeline_mode<synchronous>, transform_indices = @transform_11, window_bounds = array<i64: 128, 128>}, {pipeline_mode = #tpu.pipeline_mode<synchronous>, transform_indices = @transform_12, window_bounds = array<i64: 1, 128>}, {transform_indices = @transform_13, window_bounds = array<i64: 8, 128>}]} {
    %c0 = arith.constant 0 : index
    %c0_0 = arith.constant 0 : index
    %0 = vector.load %arg3[%c0, %c0_0] : memref<32x128xbf16, #tpu.memory_space<vmem>>, vector<32x128xbf16>
    %c0_1 = arith.constant 0 : index
    %c0_2 = arith.constant 0 : index
    %1 = vector.load %arg4[%c0_1, %c0_2] : memref<32x128xbf16, #tpu.memory_space<vmem>>, vector<32x128xbf16>
    %c0_3 = arith.constant 0 : index
    %c0_4 = arith.constant 0 : index
    %2 = vector.load %arg5[%c0_3, %c0_4] : memref<1x128xf32, #tpu.memory_space<vmem>>, vector<1x128xf32>
    %c0_5 = arith.constant 0 : index
    %c0_6 = arith.constant 0 : index
    %3 = vector.load %arg1[%c0_5, %c0_6] : memref<8x32xf32, #tpu.memory_space<vmem>>, vector<8x32xf32>
    %4 = arith.truncf %3 : vector<8x32xf32> to vector<8x32xbf16>
    %cst = arith.constant dense<0.000000e+00> : vector<8x128xf32>
    %5 = tpu.matmul %4, %0, %cst {dimension_numbers = #tpu.dot_dimension_numbers<[1], [0], [0], [1], [0, 0, 1, 1], [], []>} : vector<8x32xbf16>, vector<32x128xbf16>, vector<8x128xf32> -> vector<8x128xf32>
    %c0_7 = arith.constant 0 : index
    %c0_8 = arith.constant 0 : index
    %6 = vector.load %arg2[%c0_7, %c0_8] : memref<8x32xf32, #tpu.memory_space<vmem>>, vector<8x32xf32>
    %7 = arith.truncf %6 : vector<8x32xf32> to vector<8x32xbf16>
    %cst_9 = arith.constant dense<0.000000e+00> : vector<8x128xf32>
    %8 = tpu.matmul %7, %1, %cst_9 {dimension_numbers = #tpu.dot_dimension_numbers<[1], [0], [0], [1], [0, 0, 1, 1], [], []>} : vector<8x32xbf16>, vector<32x128xbf16>, vector<8x128xf32> -> vector<8x128xf32>
    %9 = arith.addf %5, %8 : vector<8x128xf32>
    %10 = vector.broadcast %2 : vector<1x128xf32> to vector<8x128xf32>
    %11 = arith.addf %9, %10 : vector<8x128xf32>
    %cst_10 = arith.constant 0.000000e+00 : f32
    %12 = vector.broadcast %cst_10 : f32 to vector<8x128xf32>
    %13 = arith.maximumf %11, %12 : vector<8x128xf32>
    %c0_11 = arith.constant 0 : index
    %c0_12 = arith.constant 0 : index
    %14 = vector.load %arg6[%c0_11, %c0_12] : memref<128x128xbf16, #tpu.memory_space<vmem>>, vector<128x128xbf16>
    %c0_13 = arith.constant 0 : index
    %c0_14 = arith.constant 0 : index
    %15 = vector.load %arg7[%c0_13, %c0_14] : memref<1x128xf32, #tpu.memory_space<vmem>>, vector<1x128xf32>
    %16 = arith.truncf %13 : vector<8x128xf32> to vector<8x128xbf16>
    %cst_15 = arith.constant dense<0.000000e+00> : vector<8x128xf32>
    %17 = tpu.matmul %16, %14, %cst_15 {dimension_numbers = #tpu.dot_dimension_numbers<[1], [0], [0], [1], [0, 0, 1, 1], [], []>} : vector<8x128xbf16>, vector<128x128xbf16>, vector<8x128xf32> -> vector<8x128xf32>
    %18 = vector.broadcast %15 : vector<1x128xf32> to vector<8x128xf32>
    %19 = arith.addf %17, %18 : vector<8x128xf32>
    %c0_16 = arith.constant 0 : index
    %c0_17 = arith.constant 0 : index
    %20 = vector.load %arg8[%c0_16, %c0_17] : memref<128x128xbf16, #tpu.memory_space<vmem>>, vector<128x128xbf16>
    %c0_18 = arith.constant 0 : index
    %c0_19 = arith.constant 0 : index
    %21 = vector.load %arg9[%c0_18, %c0_19] : memref<1x128xf32, #tpu.memory_space<vmem>>, vector<1x128xf32>
    %22 = arith.truncf %19 : vector<8x128xf32> to vector<8x128xbf16>
    %cst_20 = arith.constant dense<0.000000e+00> : vector<8x128xf32>
    %23 = tpu.matmul %22, %20, %cst_20 {dimension_numbers = #tpu.dot_dimension_numbers<[1], [0], [0], [1], [0, 0, 1, 1], [], []>} : vector<8x128xbf16>, vector<128x128xbf16>, vector<8x128xf32> -> vector<8x128xf32>
    %24 = vector.broadcast %21 : vector<1x128xf32> to vector<8x128xf32>
    %25 = arith.addf %23, %24 : vector<8x128xf32>
    %cst_21 = arith.constant 0.000000e+00 : f32
    %26 = vector.broadcast %cst_21 : f32 to vector<8x128xf32>
    %27 = arith.maximumf %25, %26 : vector<8x128xf32>
    %c0_22 = arith.constant 0 : index
    %c0_23 = arith.constant 0 : index
    %28 = vector.load %arg10[%c0_22, %c0_23] : memref<128x128xbf16, #tpu.memory_space<vmem>>, vector<128x128xbf16>
    %c0_24 = arith.constant 0 : index
    %c0_25 = arith.constant 0 : index
    %29 = vector.load %arg11[%c0_24, %c0_25] : memref<1x128xf32, #tpu.memory_space<vmem>>, vector<1x128xf32>
    %30 = arith.truncf %27 : vector<8x128xf32> to vector<8x128xbf16>
    %cst_26 = arith.constant dense<0.000000e+00> : vector<8x128xf32>
    %31 = tpu.matmul %30, %28, %cst_26 {dimension_numbers = #tpu.dot_dimension_numbers<[1], [0], [0], [1], [0, 0, 1, 1], [], []>} : vector<8x128xbf16>, vector<128x128xbf16>, vector<8x128xf32> -> vector<8x128xf32>
    %32 = vector.broadcast %29 : vector<1x128xf32> to vector<8x128xf32>
    %33 = arith.addf %31, %32 : vector<8x128xf32>
    %c0_27 = arith.constant 0 : index
    %c0_28 = arith.constant 0 : index
    %34 = vector.load %arg12[%c0_27, %c0_28] : memref<128x128xbf16, #tpu.memory_space<vmem>>, vector<128x128xbf16>
    %c0_29 = arith.constant 0 : index
    %c0_30 = arith.constant 0 : index
    %35 = vector.load %arg13[%c0_29, %c0_30] : memref<1x128xf32, #tpu.memory_space<vmem>>, vector<1x128xf32>
    %36 = arith.truncf %33 : vector<8x128xf32> to vector<8x128xbf16>
    %cst_31 = arith.constant dense<0.000000e+00> : vector<8x128xf32>
    %37 = tpu.matmul %36, %34, %cst_31 {dimension_numbers = #tpu.dot_dimension_numbers<[1], [0], [0], [1], [0, 0, 1, 1], [], []>} : vector<8x128xbf16>, vector<128x128xbf16>, vector<8x128xf32> -> vector<8x128xf32>
    %38 = vector.broadcast %35 : vector<1x128xf32> to vector<8x128xf32>
    %39 = arith.addf %37, %38 : vector<8x128xf32>
    %c0_32 = arith.constant 0 : index
    %c0_33 = arith.constant 0 : index
    %40 = vector.load %arg14[%c0_32, %c0_33] : memref<8x128xf32, #tpu.memory_space<vmem>>, vector<8x128xf32>
    tpu.vector_store %arg14[%c0_32, %c0_33], %39 {strides = array<i32>} : memref<8x128xf32, #tpu.memory_space<vmem>>, vector<8x128xf32>,
    return
  }
  func.func @transform_0(%arg0: i32) -> (i32, i32) {
    %c0_i32 = arith.constant 0 : i32
    %c0_i32_0 = arith.constant 0 : i32
    return %arg0, %c0_i32 : i32, i32
  }
  func.func @transform_1(%arg0: i32) -> (i32, i32) {
    %c0_i32 = arith.constant 0 : i32
    %c0_i32_0 = arith.constant 0 : i32
    return %arg0, %c0_i32 : i32, i32
  }
  func.func @transform_2(%arg0: i32) -> (i32, i32) {
    %c0_i32 = arith.constant 0 : i32
    %c0_i32_0 = arith.constant 0 : i32
    %c0_i32_1 = arith.constant 0 : i32
    return %c0_i32, %c0_i32_0 : i32, i32
  }
  func.func @transform_3(%arg0: i32) -> (i32, i32) {
    %c0_i32 = arith.constant 0 : i32
    %c0_i32_0 = arith.constant 0 : i32
    %c0_i32_1 = arith.constant 0 : i32
    return %c0_i32, %c0_i32_0 : i32, i32
  }
  func.func @transform_4(%arg0: i32) -> (i32, i32) {
    %c0_i32 = arith.constant 0 : i32
    %c0_i32_0 = arith.constant 0 : i32
    %c0_i32_1 = arith.constant 0 : i32
    return %c0_i32, %c0_i32_0 : i32, i32
  }
  func.func @transform_5(%arg0: i32) -> (i32, i32) {
    %c0_i32 = arith.constant 0 : i32
    %c0_i32_0 = arith.constant 0 : i32
    %c0_i32_1 = arith.constant 0 : i32
    return %c0_i32, %c0_i32_0 : i32, i32
  }
  func.func @transform_6(%arg0: i32) -> (i32, i32) {
    %c0_i32 = arith.constant 0 : i32
    %c0_i32_0 = arith.constant 0 : i32
    %c0_i32_1 = arith.constant 0 : i32
    return %c0_i32, %c0_i32_0 : i32, i32
  }
  func.func @transform_7(%arg0: i32) -> (i32, i32) {
    %c0_i32 = arith.constant 0 : i32
    %c0_i32_0 = arith.constant 0 : i32
    %c0_i32_1 = arith.constant 0 : i32
    return %c0_i32, %c0_i32_0 : i32, i32
  }
  func.func @transform_8(%arg0: i32) -> (i32, i32) {
    %c0_i32 = arith.constant 0 : i32
    %c0_i32_0 = arith.constant 0 : i32
    %c0_i32_1 = arith.constant 0 : i32
    return %c0_i32, %c0_i32_0 : i32, i32
  }
  func.func @transform_9(%arg0: i32) -> (i32, i32) {
    %c0_i32 = arith.constant 0 : i32
    %c0_i32_0 = arith.constant 0 : i32
    %c0_i32_1 = arith.constant 0 : i32
    return %c0_i32, %c0_i32_0 : i32, i32
  }
  func.func @transform_10(%arg0: i32) -> (i32, i32) {
    %c0_i32 = arith.constant 0 : i32
    %c0_i32_0 = arith.constant 0 : i32
    %c0_i32_1 = arith.constant 0 : i32
    return %c0_i32, %c0_i32_0 : i32, i32
  }
  func.func @transform_11(%arg0: i32) -> (i32, i32) {
    %c0_i32 = arith.constant 0 : i32
    %c0_i32_0 = arith.constant 0 : i32
    %c0_i32_1 = arith.constant 0 : i32
    return %c0_i32, %c0_i32_0 : i32, i32
  }
  func.func @transform_12(%arg0: i32) -> (i32, i32) {
    %c0_i32 = arith.constant 0 : i32
    %c0_i32_0 = arith.constant 0 : i32
    %c0_i32_1 = arith.constant 0 : i32
    return %c0_i32, %c0_i32_0 : i32, i32
  }
  func.func @transform_13(%arg0: i32) -> (i32, i32) {
    %c0_i32 = arith.constant 0 : i32
    %c0_i32_0 = arith.constant 0 : i32
    return %arg0, %c0_i32 : i32, i32
  }
}

</mosaic_0001>

<llo_original>
// kernel: tpu_custom_call.1
$region0: #{tpu_custom_call.1}
  #allocation0 [shape = 'u32[]', space=smem, size = 0x4, offset = 0x4, fixed_abs, tag = 'smem constant byte address 0x4 - core index']
  #allocation1 [shape = 'u32[144,128]{1,0:T(1,128)}', space=vmem, size = 0x12000, scoped, tag = 'internal scratch']
  %s0 = inlined_call_operand.hbm [shape: f32[8,32], index: 0, kind: input, shape index: {}]
  %s1 = inlined_call_operand.hbm [shape: f32[8,32], index: 1, kind: input, shape index: {}]
  %s2 = inlined_call_operand.hbm [shape: bf16[32,128], index: 2, kind: input, shape index: {}]
  %s3 = inlined_call_operand.hbm [shape: bf16[32,128], index: 3, kind: input, shape index: {}]
  %s4 = inlined_call_operand.vmem [shape: f32[1,128], index: 4, kind: input, shape index: {}]
  %s5 = inlined_call_operand.hbm [shape: bf16[128,128], index: 5, kind: input, shape index: {}]
  %s6 = inlined_call_operand.vmem [shape: f32[1,128], index: 6, kind: input, shape index: {}]
  %s7 = inlined_call_operand.hbm [shape: bf16[128,128], index: 7, kind: input, shape index: {}]
  %s8 = inlined_call_operand.vmem [shape: f32[1,128], index: 8, kind: input, shape index: {}]
  %s9 = inlined_call_operand.hbm [shape: bf16[128,128], index: 9, kind: input, shape index: {}]
  %s10 = inlined_call_operand.vmem [shape: f32[1,128], index: 10, kind: input, shape index: {}]
  %s11 = inlined_call_operand.hbm [shape: bf16[128,128], index: 11, kind: input, shape index: {}]
  %s12 = inlined_call_operand.vmem [shape: f32[1,128], index: 12, kind: input, shape index: {}]
  %s13 = inlined_call_operand.hbm [shape: f32[8,128], index: 13, kind: output, shape index: {}]
  %s14 = sld [smem:[#allocation0]]
  $region94: #{tpu_custom_call.1} parent=0
    _
  %s16 = ssub.s32 1, %s14
  %s17 = scalar_select 0, %s16, %s14
  $region1: #{tpu_custom_call.1} parent=0
    #allocation2 [shape = 'u8[4096]{0}', space=vmem, size = 0x1000, scoped, tag = 'input window, operand 0, single buffered']
    #allocation3 [shape = 's32[1]{0}', space=sflag, size = 0x4, scoped, tag = 'scoped memory for tpu_custom_call.1']
    #allocation4 [shape = 's32[1]{0}', space=sflag, size = 0x4, scoped, tag = 'scoped memory for tpu_custom_call.1']
    #allocation5 [shape = 'u8[4096]{0}', space=vmem, size = 0x1000, scoped, tag = 'input window, operand 1, single buffered']
    #allocation6 [shape = 's32[1]{0}', space=sflag, size = 0x4, scoped, tag = 'scoped memory for tpu_custom_call.1']
    #allocation7 [shape = 'u8[8192]{0}', space=vmem, size = 0x2000, scoped, tag = 'input window, operand 2, single buffered']
    #allocation8 [shape = 'u8[8192]{0}', space=vmem, size = 0x2000, scoped, tag = 'input window, operand 3, single buffered']
    #allocation9 [shape = 's32[1]{0}', space=sflag, size = 0x4, scoped, tag = 'scoped memory for tpu_custom_call.1']
    #allocation10 [shape = 'u8[32768]{0}', space=vmem, size = 0x8000, scoped, tag = 'input window, operand 5, single buffered']
    #allocation11 [shape = 'u8[32768]{0}', space=vmem, size = 0x8000, scoped, tag = 'input window, operand 7, single buffered']
    #allocation12 [shape = 's32[1]{0}', space=sflag, size = 0x4, scoped, tag = 'scoped memory for tpu_custom_call.1']
    #allocation13 [shape = 'u8[32768]{0}', space=vmem, size = 0x8000, scoped, tag = 'input window, operand 9, single buffered']
    #allocation14 [shape = 'u8[32768]{0}', space=vmem, size = 0x8000, scoped, tag = 'input window, operand 11, single buffered']
    #allocation15 [shape = 's32[1]{0}', space=sflag, size = 0x4, scoped, tag = 'scoped memory for tpu_custom_call.1']
    #allocation16 [shape = 'u8[4096]{0}', space=vmem, size = 0x1000, scoped, tag = 'output window, operand 0, single buffered']
    %18 = vsyncpa [#allocation3], 0
    %19 = vsyncpa [#allocation6], 0
    %20 = vsyncpa [#allocation9], 0
    %21 = vsyncpa [#allocation12], 0
    %22 = vsyncpa [#allocation15], 0
    %23 = vsyncpa [#allocation4], 0
    // Predicated region
    $region2: #{tpu_custom_call.1} parent=1 // pred_check
      _
    $region3: #{tpu_custom_call.1} parent=1 // pred_check_branch
      %25 = sbr.rel (0) target = $region5
    $region4: #{tpu_custom_call.1} parent=1 // pred_region
      %s27 = ssub.s32 128, 128
      %28 = vsyncadd [#allocation3], %s27
      %s30 = sshll.u32 [#allocation2], 4
      %s31 = int_to_ptr.vmem [resolvable:$true] %s30
      %33 = dma.hbm_to_vmem [thread:$0]  %s0, 128, %s31, [#allocation3]
    $region5: #{tpu_custom_call.1} parent=1 // pred_fallthru
      _
    // Predicated region
    $region6: #{tpu_custom_call.1} parent=1 // pred_check
      _
    $region7: #{tpu_custom_call.1} parent=1 // pred_check_branch
      %35 = sbr.rel (0) target = $region9
    $region8: #{tpu_custom_call.1} parent=1 // pred_region
      %s37 = ssub.s32 128, 128
      %38 = vsyncadd [#allocation6], %s37
      %s40 = sshll.u32 [#allocation5], 4
      %s41 = int_to_ptr.vmem [resolvable:$true] %s40
      %43 = dma.hbm_to_vmem [thread:$0]  %s1, 128, %s41, [#allocation6]
    $region9: #{tpu_custom_call.1} parent=1 // pred_fallthru
      _
    // Predicated region
    $region10: #{tpu_custom_call.1} parent=1 // pred_check
      _
    $region11: #{tpu_custom_call.1} parent=1 // pred_check_branch
      %45 = sbr.rel (0) target = $region13
    $region12: #{tpu_custom_call.1} parent=1 // pred_region
      %s47 = ssub.s32 256, 256
      %48 = vsyncadd [#allocation6], %s47
      %s49 = sshll.u32 [#allocation7], 4
      %s50 = int_to_ptr.vmem [resolvable:$true] %s49
      %55 = dma.hbm_to_vmem [thread:$0]  %s2, 256, %s50, [#allocation6], 64, 64, 4
    $region13: #{tpu_custom_call.1} parent=1 // pred_fallthru
      _
    // Predicated region
    $region14: #{tpu_custom_call.1} parent=1 // pred_check
      _
    $region15: #{tpu_custom_call.1} parent=1 // pred_check_branch
      %57 = sbr.rel (0) target = $region17
    $region16: #{tpu_custom_call.1} parent=1 // pred_region
      %s59 = ssub.s32 256, 256
      %60 = vsyncadd [#allocation9], %s59
      %s61 = sshll.u32 [#allocation8], 4
      %s62 = int_to_ptr.vmem [resolvable:$true] %s61
      %67 = dma.hbm_to_vmem [thread:$0]  %s3, 256, %s62, [#allocation9], 64, 64, 4
    $region17: #{tpu_custom_call.1} parent=1 // pred_fallthru
      _
    // Predicated region
    $region18: #{tpu_custom_call.1} parent=1 // pred_check
      _
    $region19: #{tpu_custom_call.1} parent=1 // pred_check_branch
      %69 = sbr.rel (0) target = $region21
    $region20: #{tpu_custom_call.1} parent=1 // pred_region
      _
    $region21: #{tpu_custom_call.1} parent=1 // pred_fallthru
      _
    // Predicated region
    $region22: #{tpu_custom_call.1} parent=1 // pred_check
      _
    $region23: #{tpu_custom_call.1} parent=1 // pred_check_branch
      %71 = sbr.rel (0) target = $region25
    $region24: #{tpu_custom_call.1} parent=1 // pred_region
      %s73 = ssub.s32 1024, 1024
      %74 = vsyncadd [#allocation9], %s73
      %s75 = sshll.u32 [#allocation10], 4
      %s76 = int_to_ptr.vmem [resolvable:$true] %s75
      %81 = dma.hbm_to_vmem [thread:$0]  %s5, 1024, %s76, [#allocation9], 64, 64, 4
    $region25: #{tpu_custom_call.1} parent=1 // pred_fallthru
      _
    // Predicated region
    $region26: #{tpu_custom_call.1} parent=1 // pred_check
      _
    $region27: #{tpu_custom_call.1} parent=1 // pred_check_branch
      %83 = sbr.rel (0) target = $region29
    $region28: #{tpu_custom_call.1} parent=1 // pred_region
      _
    $region29: #{tpu_custom_call.1} parent=1 // pred_fallthru
      _
    // Predicated region
    $region30: #{tpu_custom_call.1} parent=1 // pred_check
      _
    $region31: #{tpu_custom_call.1} parent=1 // pred_check_branch
      %85 = sbr.rel (0) target = $region33
    $region32: #{tpu_custom_call.1} parent=1 // pred_region
      %s87 = ssub.s32 1024, 1024
      %88 = vsyncadd [#allocation12], %s87
      %s89 = sshll.u32 [#allocation11], 4
      %s90 = int_to_ptr.vmem [resolvable:$true] %s89
      %95 = dma.hbm_to_vmem [thread:$0]  %s7, 1024, %s90, [#allocation12], 64, 64, 4
    $region33: #{tpu_custom_call.1} parent=1 // pred_fallthru
      _
    // Predicated region
    $region34: #{tpu_custom_call.1} parent=1 // pred_check
      _
    $region35: #{tpu_custom_call.1} parent=1 // pred_check_branch
      %97 = sbr.rel (0) target = $region37
    $region36: #{tpu_custom_call.1} parent=1 // pred_region
      _
    $region37: #{tpu_custom_call.1} parent=1 // pred_fallthru
      _
    // Predicated region
    $region38: #{tpu_custom_call.1} parent=1 // pred_check
      _
    $region39: #{tpu_custom_call.1} parent=1 // pred_check_branch
      %99 = sbr.rel (0) target = $region41
    $region40: #{tpu_custom_call.1} parent=1 // pred_region
      %s101 = ssub.s32 1024, 1024
      %102 = vsyncadd [#allocation12], %s101
      %s103 = sshll.u32 [#allocation13], 4
      %s104 = int_to_ptr.vmem [resolvable:$true] %s103
      %109 = dma.hbm_to_vmem [thread:$0]  %s9, 1024, %s104, [#allocation12], 64, 64, 4
    $region41: #{tpu_custom_call.1} parent=1 // pred_fallthru
      _
    // Predicated region
    $region42: #{tpu_custom_call.1} parent=1 // pred_check
      _
    $region43: #{tpu_custom_call.1} parent=1 // pred_check_branch
      %111 = sbr.rel (0) target = $region45
    $region44: #{tpu_custom_call.1} parent=1 // pred_region
      _
    $region45: #{tpu_custom_call.1} parent=1 // pred_fallthru
      _
    // Predicated region
    $region46: #{tpu_custom_call.1} parent=1 // pred_check
      _
    $region47: #{tpu_custom_call.1} parent=1 // pred_check_branch
      %113 = sbr.rel (0) target = $region49
    $region48: #{tpu_custom_call.1} parent=1 // pred_region
      %s115 = ssub.s32 1024, 1024
      %116 = vsyncadd [#allocation15], %s115
      %s117 = sshll.u32 [#allocation14], 4
      %s118 = int_to_ptr.vmem [resolvable:$true] %s117
      %123 = dma.hbm_to_vmem [thread:$0]  %s11, 1024, %s118, [#allocation15], 64, 64, 4
    $region49: #{tpu_custom_call.1} parent=1 // pred_fallthru
      _
    // Predicated region
    $region50: #{tpu_custom_call.1} parent=1 // pred_check
      _
    $region51: #{tpu_custom_call.1} parent=1 // pred_check_branch
      %125 = sbr.rel (0) target = $region53
    $region52: #{tpu_custom_call.1} parent=1 // pred_region
      _
    $region53: #{tpu_custom_call.1} parent=1 // pred_fallthru
      _
    // Predicated region
    $region54: #{tpu_custom_call.1} parent=1 // pred_check
      _
    $region55: #{tpu_custom_call.1} parent=1 // pred_check_branch
      %127 = sbr.rel (0) target = $region57
    $region56: #{tpu_custom_call.1} parent=1 // pred_region
      %128 = dma.done [#allocation3], 128
    $region57: #{tpu_custom_call.1} parent=1 // pred_fallthru
      _
    // Predicated region
    $region58: #{tpu_custom_call.1} parent=1 // pred_check
      _
    $region59: #{tpu_custom_call.1} parent=1 // pred_check_branch
      %130 = sbr.rel (0) target = $region61
    $region60: #{tpu_custom_call.1} parent=1 // pred_region
      %131 = dma.done [#allocation6], 128
    $region61: #{tpu_custom_call.1} parent=1 // pred_fallthru
      _
    // Predicated region
    $region62: #{tpu_custom_call.1} parent=1 // pred_check
      _
    $region63: #{tpu_custom_call.1} parent=1 // pred_check_branch
      %133 = sbr.rel (0) target = $region65
    $region64: #{tpu_custom_call.1} parent=1 // pred_region
      %134 = dma.done [#allocation6], 256
    $region65: #{tpu_custom_call.1} parent=1 // pred_fallthru
      _
    // Predicated region
    $region66: #{tpu_custom_call.1} parent=1 // pred_check
      _
    $region67: #{tpu_custom_call.1} parent=1 // pred_check_branch
      %136 = sbr.rel (0) target = $region69
    $region68: #{tpu_custom_call.1} parent=1 // pred_region
      %137 = dma.done [#allocation9], 256
    $region69: #{tpu_custom_call.1} parent=1 // pred_fallthru
      _
    // Predicated region
    $region70: #{tpu_custom_call.1} parent=1 // pred_check
      _
    $region71: #{tpu_custom_call.1} parent=1 // pred_check_branch
      %139 = sbr.rel (0) target = $region73
    $region72: #{tpu_custom_call.1} parent=1 // pred_region
      %140 = dma.done [#allocation9], 1024
    $region73: #{tpu_custom_call.1} parent=1 // pred_fallthru
      _
    // Predicated region
    $region74: #{tpu_custom_call.1} parent=1 // pred_check
      _
    $region75: #{tpu_custom_call.1} parent=1 // pred_check_branch
      %142 = sbr.rel (0) target = $region77
    $region76: #{tpu_custom_call.1} parent=1 // pred_region
      %143 = dma.done [#allocation12], 1024
    $region77: #{tpu_custom_call.1} parent=1 // pred_fallthru
      _
    // Predicated region
    $region78: #{tpu_custom_call.1} parent=1 // pred_check
      _
    $region79: #{tpu_custom_call.1} parent=1 // pred_check_branch
      %145 = sbr.rel (0) target = $region81
    $region80: #{tpu_custom_call.1} parent=1 // pred_region
      %146 = dma.done [#allocation12], 1024
    $region81: #{tpu_custom_call.1} parent=1 // pred_fallthru
      _
    // Predicated region
    $region82: #{tpu_custom_call.1} parent=1 // pred_check
      _
    $region83: #{tpu_custom_call.1} parent=1 // pred_check_branch
      %148 = sbr.rel (0) target = $region85
    $region84: #{tpu_custom_call.1} parent=1 // pred_region
      %149 = dma.done [#allocation15], 1024
    $region85: #{tpu_custom_call.1} parent=1 // pred_fallthru
      _
    %v151 = vld [vmem:[#allocation7] sm:$0xf]
    %v152 = vld [vmem:[#allocation7 + $0x4] sm:$0xf]
    %v153 = vld [vmem:[#allocation7 + $0x8] sm:$0xf]
    %v154 = vld [vmem:[#allocation7 + $0xc] sm:$0xf]
    %v155 = vld [vmem:[#allocation8] sm:$0xf]
    %v156 = vld [vmem:[#allocation8 + $0x4] sm:$0xf]
    %v157 = vld [vmem:[#allocation8 + $0x8] sm:$0xf]
    %v158 = vld [vmem:[#allocation8 + $0xc] sm:$0xf]
    %v159 = vld [vmem:[%s4] sm:$0x1]
    %v160 = vld [vmem:[#allocation2] sm:$0xff]
    %v161 = vpack.c.bf16 %v160, %v160
    %v162 = vld [vmem:[#allocation5] sm:$0xff]
    %v163 = vpack.c.bf16 %v162, %v162
    %v168 = vunpack.c.l.b16 %v155
    %v169 = vunpack.c.l.b16 %v156
    %v170 = vunpack.c.l.b16 %v157
    %v171 = vunpack.c.l.b16 %v158
    %v172 = vpack.c.b16 %v169, %v168
    %v173 = vpack.c.b16 %v171, %v170
    %vm176 = vcmask 261120
    %v178 = vsel %vm176, %v163, 0
    %180 = vmatprep.subr.bf16.mxu0 0
    %181 = vmatpush1.bf16.msra.mxu0 %v172
    %182 = vmatprep.subr.bf16.mxu0 0
    %183 = vmatpush1.bf16.msra.mxu0 %v173
    %184 = vmatprep.subr.bf16.mxu0 0
    %185 = vmatpush1.bf16.msra.mxu0 0
    %186 = vmatprep.subr.bf16.mxu0 0
    %187 = vmatpush1.bf16.msra.mxu0 0
    %188 = vmatprep.subr.bf16.mxu0 0
    %189 = vmatpush1.bf16.msra.mxu0 0
    %190 = vmatprep.subr.bf16.mxu0 0
    %191 = vmatpush1.bf16.msra.mxu0 0
    %192 = vmatprep.subr.bf16.mxu0 0
    %193 = vmatpush1.bf16.msra.mxu0 0
    %194 = vmatprep.subr.bf16.mxu0 0
    %195 = vmatpush1.bf16.msra.mxu0 0
    %196 = vmatprep.subr.bf16.mxu0 0
    %197 = vmatpush1.bf16.msra.mxu0 0
    %198 = vmatprep.subr.bf16.mxu0 0
    %199 = vmatpush1.bf16.msra.mxu0 0
    %200 = vmatprep.subr.bf16.mxu0 0
    %201 = vmatpush1.bf16.msra.mxu0 0
    %202 = vmatprep.subr.bf16.mxu0 0
    %203 = vmatpush1.bf16.msra.mxu0 0
    %204 = vmatprep.subr.bf16.mxu0 0
    %205 = vmatpush1.bf16.msra.mxu0 0
    %206 = vmatprep.subr.bf16.mxu0 0
    %207 = vmatpush1.bf16.msra.mxu0 0
    %208 = vmatprep.subr.bf16.mxu0 0
    %209 = vmatpush1.bf16.msra.mxu0 0
    %210 = vmatprep.subr.bf16.mxu0 0
    %211 = vmatpush1.bf16.msra.mxu0 0
    %212 = vmatprep.mubr.bf16.mxu0 0
    %213 = vmatmul.mubr.bf16.gmra.mrb[0].mxu0 %v178
    %v214 = vpop.f32.mrb[0].mxu0
    %v215 = vadd.f32 0.0, %v214
    %v216 = vpop.f32.mrb[0].mxu0
    %v217 = vpop.f32.mrb[0].mxu0
    %v218 = vpop.f32.mrb[0].mxu0
    %219 = vdwg.mxu0
    %v224 = vunpack.c.l.b16 %v151
    %v225 = vunpack.c.l.b16 %v152
    %v226 = vunpack.c.l.b16 %v153
    %v227 = vunpack.c.l.b16 %v154
    %v228 = vpack.c.b16 %v225, %v224
    %v229 = vpack.c.b16 %v227, %v226
    %v233 = vsel %vm176, %v161, 0
    %235 = vmatprep.subr.bf16.mxu0 0
    %236 = vmatpush1.bf16.msra.mxu0 %v228
    %237 = vmatprep.subr.bf16.mxu0 0
    %238 = vmatpush1.bf16.msra.mxu0 %v229
    %239 = vmatprep.subr.bf16.mxu0 0
    %240 = vmatpush1.bf16.msra.mxu0 0
    %241 = vmatprep.subr.bf16.mxu0 0
    %242 = vmatpush1.bf16.msra.mxu0 0
    %243 = vmatprep.subr.bf16.mxu0 0
    %244 = vmatpush1.bf16.msra.mxu0 0
    %245 = vmatprep.subr.bf16.mxu0 0
    %246 = vmatpush1.bf16.msra.mxu0 0
    %247 = vmatprep.subr.bf16.mxu0 0
    %248 = vmatpush1.bf16.msra.mxu0 0
    %249 = vmatprep.subr.bf16.mxu0 0
    %250 = vmatpush1.bf16.msra.mxu0 0
    %251 = vmatprep.subr.bf16.mxu0 0
    %252 = vmatpush1.bf16.msra.mxu0 0
    %253 = vmatprep.subr.bf16.mxu0 0
    %254 = vmatpush1.bf16.msra.mxu0 0
    %255 = vmatprep.subr.bf16.mxu0 0
    %256 = vmatpush1.bf16.msra.mxu0 0
    %257 = vmatprep.subr.bf16.mxu0 0
    %258 = vmatpush1.bf16.msra.mxu0 0
    %259 = vmatprep.subr.bf16.mxu0 0
    %260 = vmatpush1.bf16.msra.mxu0 0
    %261 = vmatprep.subr.bf16.mxu0 0
    %262 = vmatpush1.bf16.msra.mxu0 0
    %263 = vmatprep.subr.bf16.mxu0 0
    %264 = vmatpush1.bf16.msra.mxu0 0
    %265 = vmatprep.subr.bf16.mxu0 0
    %266 = vmatpush1.bf16.msra.mxu0 0
    %267 = vmatprep.mubr.bf16.mxu0 0
    %268 = vmatmul.mubr.bf16.gmra.mrb[0].mxu0 %v233
    %v269 = vpop.f32.mrb[0].mxu0
    %v270 = vadd.f32 %v215, %v269
    %v271 = vpop.f32.mrb[0].mxu0
    %v272 = vpop.f32.mrb[0].mxu0
    %v273 = vpop.f32.mrb[0].mxu0
    %274 = vdwg.mxu0
    %v276 = vlaneseq
    %v277 = vshrl.u32 %v276, 7
    %v278 = vsub.s32 0, %v277
    %v279 = vrot.slane %v159, %v278
    %v281 = vadd.f32 %v270, %v279
    %v282 = vmax.f32 %v281, 0.0
    %v283 = vld [vmem:[#allocation10] sm:$0xf]
    %v284 = vld [vmem:[#allocation10 + $0x4] sm:$0xf]
    %v285 = vld [vmem:[#allocation10 + $0x8] sm:$0xf]
    %v286 = vld [vmem:[#allocation10 + $0xc] sm:$0xf]
    %v287 = vld [vmem:[#allocation10 + $0x10] sm:$0xf]
    %v288 = vld [vmem:[#allocation10 + $0x14] sm:$0xf]
    %v289 = vld [vmem:[#allocation10 + $0x18] sm:$0xf]
    %v290 = vld [vmem:[#allocation10 + $0x1c] sm:$0xf]
    %v291 = vld [vmem:[#allocation10 + $0x20] sm:$0xf]
    %v292 = vld [vmem:[#allocation10 + $0x24] sm:$0xf]
    %v293 = vld [vmem:[#allocation10 + $0x28] sm:$0xf]
    %v294 = vld [vmem:[#allocation10 + $0x2c] sm:$0xf]
    %v295 = vld [vmem:[#allocation10 + $0x30] sm:$0xf]
    %v296 = vld [vmem:[#allocation10 + $0x34] sm:$0xf]
    %v297 = vld [vmem:[#allocation10 + $0x38] sm:$0xf]
    %v298 = vld [vmem:[#allocation10 + $0x3c] sm:$0xf]
    %v299 = vld [vmem:[%s6] sm:$0x1]
    %v300 = vpack.c.bf16 %v282, %v282
    %v302 = vlaneseq
    %v303 = vshrl.u32 %v302, 7
    %v304 = vsub.s32 0, %v303
    %v305 = vrot.slane %v299, %v304
    %v323 = vunpack.c.l.b16 %v283
    %v324 = vunpack.c.l.b16 %v284
    %v325 = vunpack.c.l.b16 %v285
    %v326 = vunpack.c.l.b16 %v286
    %v327 = vunpack.c.l.b16 %v287
    %v328 = vunpack.c.l.b16 %v288
    %v329 = vunpack.c.l.b16 %v289
    %v330 = vunpack.c.l.b16 %v290
    %v331 = vunpack.c.l.b16 %v291
    %v332 = vunpack.c.l.b16 %v292
    %v333 = vunpack.c.l.b16 %v293
    %v334 = vunpack.c.l.b16 %v294
    %v335 = vunpack.c.l.b16 %v295
    %v336 = vunpack.c.l.b16 %v296
    %v337 = vunpack.c.l.b16 %v297
    %v338 = vunpack.c.l.b16 %v298
    %v339 = vpack.c.b16 %v324, %v323
    %v340 = vpack.c.b16 %v326, %v325
    %v341 = vpack.c.b16 %v328, %v327
    %v342 = vpack.c.b16 %v330, %v329
    %v343 = vpack.c.b16 %v332, %v331
    %v344 = vpack.c.b16 %v334, %v333
    %v345 = vpack.c.b16 %v336, %v335
    %v346 = vpack.c.b16 %v338, %v337
    %355 = vmatprep.subr.bf16.mxu0 0
    %356 = vmatpush1.bf16.msra.mxu0 %v339
    %357 = vmatprep.subr.bf16.mxu0 0
    %358 = vmatpush1.bf16.msra.mxu0 %v340
    %359 = vmatprep.subr.bf16.mxu0 0
    %360 = vmatpush1.bf16.msra.mxu0 %v341
    %361 = vmatprep.subr.bf16.mxu0 0
    %362 = vmatpush1.bf16.msra.mxu0 %v342
    %363 = vmatprep.subr.bf16.mxu0 0
    %364 = vmatpush1.bf16.msra.mxu0 %v343
    %365 = vmatprep.subr.bf16.mxu0 0
    %366 = vmatpush1.bf16.msra.mxu0 %v344
    %367 = vmatprep.subr.bf16.mxu0 0
    %368 = vmatpush1.bf16.msra.mxu0 %v345
    %369 = vmatprep.subr.bf16.mxu0 0
    %370 = vmatpush1.bf16.msra.mxu0 %v346
    %371 = vmatprep.subr.bf16.mxu0 0
    %372 = vmatpush1.bf16.msra.mxu0 0
    %373 = vmatprep.subr.bf16.mxu0 0
    %374 = vmatpush1.bf16.msra.mxu0 0
    %375 = vmatprep.subr.bf16.mxu0 0
    %376 = vmatpush1.bf16.msra.mxu0 0
    %377 = vmatprep.subr.bf16.mxu0 0
    %378 = vmatpush1.bf16.msra.mxu0 0
    %379 = vmatprep.subr.bf16.mxu0 0
    %380 = vmatpush1.bf16.msra.mxu0 0
    %381 = vmatprep.subr.bf16.mxu0 0
    %382 = vmatpush1.bf16.msra.mxu0 0
    %383 = vmatprep.subr.bf16.mxu0 0
    %384 = vmatpush1.bf16.msra.mxu0 0
    %385 = vmatprep.subr.bf16.mxu0 0
    %386 = vmatpush1.bf16.msra.mxu0 0
    %387 = vmatprep.mubr.bf16.mxu0 0
    %388 = vmatmul.mubr.bf16.gmra.mrb[0].mxu0 %v300
    %v389 = vpop.f32.mrb[0].mxu0
    %v390 = vadd.f32 %v305, %v389
    %v391 = vpop.f32.mrb[0].mxu0
    %v392 = vpop.f32.mrb[0].mxu0
    %v393 = vpop.f32.mrb[0].mxu0
    %394 = vdwg.mxu0
    %v395 = vld [vmem:[#allocation11] sm:$0xf]
    %v396 = vld [vmem:[#allocation11 + $0x4] sm:$0xf]
    %v397 = vld [vmem:[#allocation11 + $0x8] sm:$0xf]
    %v398 = vld [vmem:[#allocation11 + $0xc] sm:$0xf]
    %v399 = vld [vmem:[#allocation11 + $0x10] sm:$0xf]
    %v400 = vld [vmem:[#allocation11 + $0x14] sm:$0xf]
    %v401 = vld [vmem:[#allocation11 + $0x18] sm:$0xf]
    %v402 = vld [vmem:[#allocation11 + $0x1c] sm:$0xf]
    %v403 = vld [vmem:[#allocation11 + $0x20] sm:$0xf]
    %v404 = vld [vmem:[#allocation11 + $0x24] sm:$0xf]
    %v405 = vld [vmem:[#allocation11 + $0x28] sm:$0xf]
    %v406 = vld [vmem:[#allocation11 + $0x2c] sm:$0xf]
    %v407 = vld [vmem:[#allocation11 + $0x30] sm:$0xf]
    %v408 = vld [vmem:[#allocation11 + $0x34] sm:$0xf]
    %v409 = vld [vmem:[#allocation11 + $0x38] sm:$0xf]
    %v410 = vld [vmem:[#allocation11 + $0x3c] sm:$0xf]
    %v411 = vld [vmem:[%s8] sm:$0x1]
    %v412 = vpack.c.bf16 %v390, %v390
    %v414 = vlaneseq
    %v415 = vshrl.u32 %v414, 7
    %v416 = vsub.s32 0, %v415
    %v417 = vrot.slane %v411, %v416
    %v435 = vunpack.c.l.b16 %v395
    %v436 = vunpack.c.l.b16 %v396
    %v437 = vunpack.c.l.b16 %v397
    %v438 = vunpack.c.l.b16 %v398
    %v439 = vunpack.c.l.b16 %v399
    %v440 = vunpack.c.l.b16 %v400
    %v441 = vunpack.c.l.b16 %v401
    %v442 = vunpack.c.l.b16 %v402
    %v443 = vunpack.c.l.b16 %v403
    %v444 = vunpack.c.l.b16 %v404
    %v445 = vunpack.c.l.b16 %v405
    %v446 = vunpack.c.l.b16 %v406
    %v447 = vunpack.c.l.b16 %v407
    %v448 = vunpack.c.l.b16 %v408
    %v449 = vunpack.c.l.b16 %v409
    %v450 = vunpack.c.l.b16 %v410
    %v451 = vpack.c.b16 %v436, %v435
    %v452 = vpack.c.b16 %v438, %v437
    %v453 = vpack.c.b16 %v440, %v439
    %v454 = vpack.c.b16 %v442, %v441
    %v455 = vpack.c.b16 %v444, %v443
    %v456 = vpack.c.b16 %v446, %v445
    %v457 = vpack.c.b16 %v448, %v447
    %v458 = vpack.c.b16 %v450, %v449
    %467 = vmatprep.subr.bf16.mxu0 0
    %468 = vmatpush1.bf16.msra.mxu0 %v451
    %469 = vmatprep.subr.bf16.mxu0 0
    %470 = vmatpush1.bf16.msra.mxu0 %v452
    %471 = vmatprep.subr.bf16.mxu0 0
    %472 = vmatpush1.bf16.msra.mxu0 %v453
    %473 = vmatprep.subr.bf16.mxu0 0
    %474 = vmatpush1.bf16.msra.mxu0 %v454
    %475 = vmatprep.subr.bf16.mxu0 0
    %476 = vmatpush1.bf16.msra.mxu0 %v455
    %477 = vmatprep.subr.bf16.mxu0 0
    %478 = vmatpush1.bf16.msra.mxu0 %v456
    %479 = vmatprep.subr.bf16.mxu0 0
    %480 = vmatpush1.bf16.msra.mxu0 %v457
    %481 = vmatprep.subr.bf16.mxu0 0
    %482 = vmatpush1.bf16.msra.mxu0 %v458
    %483 = vmatprep.subr.bf16.mxu0 0
    %484 = vmatpush1.bf16.msra.mxu0 0
    %485 = vmatprep.subr.bf16.mxu0 0
    %486 = vmatpush1.bf16.msra.mxu0 0
    %487 = vmatprep.subr.bf16.mxu0 0
    %488 = vmatpush1.bf16.msra.mxu0 0
    %489 = vmatprep.subr.bf16.mxu0 0
    %490 = vmatpush1.bf16.msra.mxu0 0
    %491 = vmatprep.subr.bf16.mxu0 0
    %492 = vmatpush1.bf16.msra.mxu0 0
    %493 = vmatprep.subr.bf16.mxu0 0
    %494 = vmatpush1.bf16.msra.mxu0 0
    %495 = vmatprep.subr.bf16.mxu0 0
    %496 = vmatpush1.bf16.msra.mxu0 0
    %497 = vmatprep.subr.bf16.mxu0 0
    %498 = vmatpush1.bf16.msra.mxu0 0
    %499 = vmatprep.mubr.bf16.mxu0 0
    %500 = vmatmul.mubr.bf16.gmra.mrb[0].mxu0 %v412
    %v501 = vpop.f32.mrb[0].mxu0
    %v502 = vadd.f32 %v417, %v501
    %v503 = vpop.f32.mrb[0].mxu0
    %v504 = vpop.f32.mrb[0].mxu0
    %v505 = vpop.f32.mrb[0].mxu0
    %506 = vdwg.mxu0
    %v507 = vmax.f32 %v502, 0.0
    %v508 = vld [vmem:[#allocation13] sm:$0xf]
    %v509 = vld [vmem:[#allocation13 + $0x4] sm:$0xf]
    %v510 = vld [vmem:[#allocation13 + $0x8] sm:$0xf]
    %v511 = vld [vmem:[#allocation13 + $0xc] sm:$0xf]
    %v512 = vld [vmem:[#allocation13 + $0x10] sm:$0xf]
    %v513 = vld [vmem:[#allocation13 + $0x14] sm:$0xf]
    %v514 = vld [vmem:[#allocation13 + $0x18] sm:$0xf]
    %v515 = vld [vmem:[#allocation13 + $0x1c] sm:$0xf]
    %v516 = vld [vmem:[#allocation13 + $0x20] sm:$0xf]
    %v517 = vld [vmem:[#allocation13 + $0x24] sm:$0xf]
    %v518 = vld [vmem:[#allocation13 + $0x28] sm:$0xf]
    %v519 = vld [vmem:[#allocation13 + $0x2c] sm:$0xf]
    %v520 = vld [vmem:[#allocation13 + $0x30] sm:$0xf]
    %v521 = vld [vmem:[#allocation13 + $0x34] sm:$0xf]
    %v522 = vld [vmem:[#allocation13 + $0x38] sm:$0xf]
    %v523 = vld [vmem:[#allocation13 + $0x3c] sm:$0xf]
    %v524 = vld [vmem:[%s10] sm:$0x1]
    %v525 = vpack.c.bf16 %v507, %v507
    %v527 = vlaneseq
    %v528 = vshrl.u32 %v527, 7
    %v529 = vsub.s32 0, %v528
    %v530 = vrot.slane %v524, %v529
    %v548 = vunpack.c.l.b16 %v508
    %v549 = vunpack.c.l.b16 %v509
    %v550 = vunpack.c.l.b16 %v510
    %v551 = vunpack.c.l.b16 %v511
    %v552 = vunpack.c.l.b16 %v512
    %v553 = vunpack.c.l.b16 %v513
    %v554 = vunpack.c.l.b16 %v514
    %v555 = vunpack.c.l.b16 %v515
    %v556 = vunpack.c.l.b16 %v516
    %v557 = vunpack.c.l.b16 %v517
    %v558 = vunpack.c.l.b16 %v518
    %v559 = vunpack.c.l.b16 %v519
    %v560 = vunpack.c.l.b16 %v520
    %v561 = vunpack.c.l.b16 %v521
    %v562 = vunpack.c.l.b16 %v522
    %v563 = vunpack.c.l.b16 %v523
    %v564 = vpack.c.b16 %v549, %v548
    %v565 = vpack.c.b16 %v551, %v550
    %v566 = vpack.c.b16 %v553, %v552
    %v567 = vpack.c.b16 %v555, %v554
    %v568 = vpack.c.b16 %v557, %v556
    %v569 = vpack.c.b16 %v559, %v558
    %v570 = vpack.c.b16 %v561, %v560
    %v571 = vpack.c.b16 %v563, %v562
    %580 = vmatprep.subr.bf16.mxu0 0
    %581 = vmatpush1.bf16.msra.mxu0 %v564
    %582 = vmatprep.subr.bf16.mxu0 0
    %583 = vmatpush1.bf16.msra.mxu0 %v565
    %584 = vmatprep.subr.bf16.mxu0 0
    %585 = vmatpush1.bf16.msra.mxu0 %v566
    %586 = vmatprep.subr.bf16.mxu0 0
    %587 = vmatpush1.bf16.msra.mxu0 %v567
    %588 = vmatprep.subr.bf16.mxu0 0
    %589 = vmatpush1.bf16.msra.mxu0 %v568
    %590 = vmatprep.subr.bf16.mxu0 0
    %591 = vmatpush1.bf16.msra.mxu0 %v569
    %592 = vmatprep.subr.bf16.mxu0 0
    %593 = vmatpush1.bf16.msra.mxu0 %v570
    %594 = vmatprep.subr.bf16.mxu0 0
    %595 = vmatpush1.bf16.msra.mxu0 %v571
    %596 = vmatprep.subr.bf16.mxu0 0
    %597 = vmatpush1.bf16.msra.mxu0 0
    %598 = vmatprep.subr.bf16.mxu0 0
    %599 = vmatpush1.bf16.msra.mxu0 0
    %600 = vmatprep.subr.bf16.mxu0 0
    %601 = vmatpush1.bf16.msra.mxu0 0
    %602 = vmatprep.subr.bf16.mxu0 0
    %603 = vmatpush1.bf16.msra.mxu0 0
    %604 = vmatprep.subr.bf16.mxu0 0
    %605 = vmatpush1.bf16.msra.mxu0 0
    %606 = vmatprep.subr.bf16.mxu0 0
    %607 = vmatpush1.bf16.msra.mxu0 0
    %608 = vmatprep.subr.bf16.mxu0 0
    %609 = vmatpush1.bf16.msra.mxu0 0
    %610 = vmatprep.subr.bf16.mxu0 0
    %611 = vmatpush1.bf16.msra.mxu0 0
    %612 = vmatprep.mubr.bf16.mxu0 0
    %613 = vmatmul.mubr.bf16.gmra.mrb[0].mxu0 %v525
    %v614 = vpop.f32.mrb[0].mxu0
    %v615 = vadd.f32 %v530, %v614
    %v616 = vpop.f32.mrb[0].mxu0
    %v617 = vpop.f32.mrb[0].mxu0
    %v618 = vpop.f32.mrb[0].mxu0
    %619 = vdwg.mxu0
    %v620 = vld [vmem:[#allocation14] sm:$0xf]
    %v621 = vld [vmem:[#allocation14 + $0x4] sm:$0xf]
    %v622 = vld [vmem:[#allocation14 + $0x8] sm:$0xf]
    %v623 = vld [vmem:[#allocation14 + $0xc] sm:$0xf]
    %v624 = vld [vmem:[#allocation14 + $0x10] sm:$0xf]
    %v625 = vld [vmem:[#allocation14 + $0x14] sm:$0xf]
    %v626 = vld [vmem:[#allocation14 + $0x18] sm:$0xf]
    %v627 = vld [vmem:[#allocation14 + $0x1c] sm:$0xf]
    %v628 = vld [vmem:[#allocation14 + $0x20] sm:$0xf]
    %v629 = vld [vmem:[#allocation14 + $0x24] sm:$0xf]
    %v630 = vld [vmem:[#allocation14 + $0x28] sm:$0xf]
    %v631 = vld [vmem:[#allocation14 + $0x2c] sm:$0xf]
    %v632 = vld [vmem:[#allocation14 + $0x30] sm:$0xf]
    %v633 = vld [vmem:[#allocation14 + $0x34] sm:$0xf]
    %v634 = vld [vmem:[#allocation14 + $0x38] sm:$0xf]
    %v635 = vld [vmem:[#allocation14 + $0x3c] sm:$0xf]
    %v636 = vld [vmem:[%s12] sm:$0x1]
    %v637 = vpack.c.bf16 %v615, %v615
    %v639 = vlaneseq
    %v640 = vshrl.u32 %v639, 7
    %v641 = vsub.s32 0, %v640
    %v642 = vrot.slane %v636, %v641
    %v660 = vunpack.c.l.b16 %v620
    %v661 = vunpack.c.l.b16 %v621
    %v662 = vunpack.c.l.b16 %v622
    %v663 = vunpack.c.l.b16 %v623
    %v664 = vunpack.c.l.b16 %v624
    %v665 = vunpack.c.l.b16 %v625
    %v666 = vunpack.c.l.b16 %v626
    %v667 = vunpack.c.l.b16 %v627
    %v668 = vunpack.c.l.b16 %v628
    %v669 = vunpack.c.l.b16 %v629
    %v670 = vunpack.c.l.b16 %v630
    %v671 = vunpack.c.l.b16 %v631
    %v672 = vunpack.c.l.b16 %v632
    %v673 = vunpack.c.l.b16 %v633
    %v674 = vunpack.c.l.b16 %v634
    %v675 = vunpack.c.l.b16 %v635
    %v676 = vpack.c.b16 %v661, %v660
    %v677 = vpack.c.b16 %v663, %v662
    %v678 = vpack.c.b16 %v665, %v664
    %v679 = vpack.c.b16 %v667, %v666
    %v680 = vpack.c.b16 %v669, %v668
    %v681 = vpack.c.b16 %v671, %v670
    %v682 = vpack.c.b16 %v673, %v672
    %v683 = vpack.c.b16 %v675, %v674
    %692 = vmatprep.subr.bf16.mxu0 0
    %693 = vmatpush1.bf16.msra.mxu0 %v676
    %694 = vmatprep.subr.bf16.mxu0 0
    %695 = vmatpush1.bf16.msra.mxu0 %v677
    %696 = vmatprep.subr.bf16.mxu0 0
    %697 = vmatpush1.bf16.msra.mxu0 %v678
    %698 = vmatprep.subr.bf16.mxu0 0
    %699 = vmatpush1.bf16.msra.mxu0 %v679
    %700 = vmatprep.subr.bf16.mxu0 0
    %701 = vmatpush1.bf16.msra.mxu0 %v680
    %702 = vmatprep.subr.bf16.mxu0 0
    %703 = vmatpush1.bf16.msra.mxu0 %v681
    %704 = vmatprep.subr.bf16.mxu0 0
    %705 = vmatpush1.bf16.msra.mxu0 %v682
    %706 = vmatprep.subr.bf16.mxu0 0
    %707 = vmatpush1.bf16.msra.mxu0 %v683
    %708 = vmatprep.subr.bf16.mxu0 0
    %709 = vmatpush1.bf16.msra.mxu0 0
    %710 = vmatprep.subr.bf16.mxu0 0
    %711 = vmatpush1.bf16.msra.mxu0 0
    %712 = vmatprep.subr.bf16.mxu0 0
    %713 = vmatpush1.bf16.msra.mxu0 0
    %714 = vmatprep.subr.bf16.mxu0 0
    %715 = vmatpush1.bf16.msra.mxu0 0
    %716 = vmatprep.subr.bf16.mxu0 0
    %717 = vmatpush1.bf16.msra.mxu0 0
    %718 = vmatprep.subr.bf16.mxu0 0
    %719 = vmatpush1.bf16.msra.mxu0 0
    %720 = vmatprep.subr.bf16.mxu0 0
    %721 = vmatpush1.bf16.msra.mxu0 0
    %722 = vmatprep.subr.bf16.mxu0 0
    %723 = vmatpush1.bf16.msra.mxu0 0
    %724 = vmatprep.mubr.bf16.mxu0 0
    %725 = vmatmul.mubr.bf16.gmra.mrb[0].mxu0 %v637
    %v726 = vpop.f32.mrb[0].mxu0
    %v727 = vadd.f32 %v642, %v726
    %v728 = vpop.f32.mrb[0].mxu0
    %v729 = vpop.f32.mrb[0].mxu0
    %v730 = vpop.f32.mrb[0].mxu0
    %731 = vdwg.mxu0
    %732 = vst [vmem:[#allocation16] sm:$0xff] %v727
    // Predicated region
    $region86: #{tpu_custom_call.1} parent=1 // pred_check
      _
    $region87: #{tpu_custom_call.1} parent=1 // pred_check_branch
      %734 = sbr.rel (0) target = $region89
    $region88: #{tpu_custom_call.1} parent=1 // pred_region
      %s736 = ssub.s32 128, 128
      %737 = vsyncadd [#allocation4], %s736
      %s739 = sshll.u32 [#allocation16], 4
      %s740 = int_to_ptr.vmem [resolvable:$true] %s739
      %742 = dma.vmem_to_hbm [thread:$0]  %s740, 128, %s13, [#allocation4]
    $region89: #{tpu_custom_call.1} parent=1 // pred_fallthru
      _
    // Predicated region
    $region90: #{tpu_custom_call.1} parent=1 // pred_check
      _
    $region91: #{tpu_custom_call.1} parent=1 // pred_check_branch
      %744 = sbr.rel (0) target = $region93
    $region92: #{tpu_custom_call.1} parent=1 // pred_region
      %745 = dma.done [#allocation4], 128
    $region93: #{tpu_custom_call.1} parent=1 // pred_fallthru
      _
    %746 = vsyncpa [#allocation3], 1
    %747 = vsyncpa [#allocation6], 1
    %748 = vsyncpa [#allocation9], 1
    %749 = vsyncpa [#allocation12], 1
    %750 = vsyncpa [#allocation15], 1
    %751 = vsyncpa [#allocation4], 1

// kernel: tpu_custom_call.1
$region0: #{tpu_custom_call.1}
  #allocation0 [shape = 'u32[]', space=smem, size = 0x4, offset = 0x4, fixed_abs, tag = 'smem constant byte address 0x4 - core index']
  #allocation1 [shape = 'u32[144,128]{1,0:T(1,128)}', space=vmem, size = 0x12000, scoped, tag = 'internal scratch']
  %s0 = inlined_call_operand.hbm [shape: f32[8,32], index: 0, kind: input, shape index: {}]
  %s1 = inlined_call_operand.hbm [shape: f32[8,32], index: 1, kind: input, shape index: {}]
  %s2 = inlined_call_operand.hbm [shape: bf16[32,128], index: 2, kind: input, shape index: {}]
  %s3 = inlined_call_operand.hbm [shape: bf16[32,128], index: 3, kind: input, shape index: {}]
  %s4 = inlined_call_operand.vmem [shape: f32[1,128], index: 4, kind: input, shape index: {}]
  %s5 = inlined_call_operand.hbm [shape: bf16[128,128], index: 5, kind: input, shape index: {}]
  %s6 = inlined_call_operand.vmem [shape: f32[1,128], index: 6, kind: input, shape index: {}]
  %s7 = inlined_call_operand.hbm [shape: bf16[128,128], index: 7, kind: input, shape index: {}]
  %s8 = inlined_call_operand.vmem [shape: f32[1,128], index: 8, kind: input, shape index: {}]
  %s9 = inlined_call_operand.hbm [shape: bf16[128,128], index: 9, kind: input, shape index: {}]
  %s10 = inlined_call_operand.vmem [shape: f32[1,128], index: 10, kind: input, shape index: {}]
  %s11 = inlined_call_operand.hbm [shape: bf16[128,128], index: 11, kind: input, shape index: {}]
  %s12 = inlined_call_operand.vmem [shape: f32[1,128], index: 12, kind: input, shape index: {}]
  %s13 = inlined_call_operand.hbm [shape: f32[8,128], index: 13, kind: output, shape index: {}]
  %s14 = sld [smem:[#allocation0]]
  $region94: #{tpu_custom_call.1} parent=0
    _
  %s16 = ssub.s32 1, %s14
  %s17 = scalar_select 0, %s16, %s14
  $region1: #{tpu_custom_call.1} parent=0
    #allocation2 [shape = 'u8[4096]{0}', space=vmem, size = 0x1000, scoped, tag = 'input window, operand 0, single buffered']
    #allocation3 [shape = 's32[1]{0}', space=sflag, size = 0x4, scoped, tag = 'scoped memory for tpu_custom_call.1']
    #allocation4 [shape = 's32[1]{0}', space=sflag, size = 0x4, scoped, tag = 'scoped memory for tpu_custom_call.1']
    #allocation5 [shape = 'u8[4096]{0}', space=vmem, size = 0x1000, scoped, tag = 'input window, operand 1, single buffered']
    #allocation6 [shape = 's32[1]{0}', space=sflag, size = 0x4, scoped, tag = 'scoped memory for tpu_custom_call.1']
    #allocation7 [shape = 'u8[8192]{0}', space=vmem, size = 0x2000, scoped, tag = 'input window, operand 2, single buffered']
    #allocation8 [shape = 'u8[8192]{0}', space=vmem, size = 0x2000, scoped, tag = 'input window, operand 3, single buffered']
    #allocation9 [shape = 's32[1]{0}', space=sflag, size = 0x4, scoped, tag = 'scoped memory for tpu_custom_call.1']
    #allocation10 [shape = 'u8[32768]{0}', space=vmem, size = 0x8000, scoped, tag = 'input window, operand 5, single buffered']
    #allocation11 [shape = 'u8[32768]{0}', space=vmem, size = 0x8000, scoped, tag = 'input window, operand 7, single buffered']
    #allocation12 [shape = 's32[1]{0}', space=sflag, size = 0x4, scoped, tag = 'scoped memory for tpu_custom_call.1']
    #allocation13 [shape = 'u8[32768]{0}', space=vmem, size = 0x8000, scoped, tag = 'input window, operand 9, single buffered']
    #allocation14 [shape = 'u8[32768]{0}', space=vmem, size = 0x8000, scoped, tag = 'input window, operand 11, single buffered']
    #allocation15 [shape = 's32[1]{0}', space=sflag, size = 0x4, scoped, tag = 'scoped memory for tpu_custom_call.1']
    #allocation16 [shape = 'u8[4096]{0}', space=vmem, size = 0x1000, scoped, tag = 'output window, operand 0, single buffered']
    %18 = vsyncpa [#allocation3], 0
    %19 = vsyncpa [#allocation6], 0
    %20 = vsyncpa [#allocation9], 0
    %21 = vsyncpa [#allocation12], 0
    %22 = vsyncpa [#allocation15], 0
    %23 = vsyncpa [#allocation4], 0
    // Predicated region
    $region2: #{tpu_custom_call.1} parent=1 // pred_check
      _
    $region3: #{tpu_custom_call.1} parent=1 // pred_check_branch
      %25 = sbr.rel (0) target = $region5
    $region4: #{tpu_custom_call.1} parent=1 // pred_region
      %s27 = ssub.s32 128, 128
      %28 = vsyncadd [#allocation3], %s27
      %s30 = sshll.u32 [#allocation2], 4
      %s31 = int_to_ptr.vmem [resolvable:$true] %s30
      %33 = dma.hbm_to_vmem [thread:$0]  %s0, 128, %s31, [#allocation3]
    $region5: #{tpu_custom_call.1} parent=1 // pred_fallthru
      _
    // Predicated region
    $region6: #{tpu_custom_call.1} parent=1 // pred_check
      _
    $region7: #{tpu_custom_call.1} parent=1 // pred_check_branch
      %35 = sbr.rel (0) target = $region9
    $region8: #{tpu_custom_call.1} parent=1 // pred_region
      %s37 = ssub.s32 128, 128
      %38 = vsyncadd [#allocation6], %s37
      %s40 = sshll.u32 [#allocation5], 4
      %s41 = int_to_ptr.vmem [resolvable:$true] %s40
      %43 = dma.hbm_to_vmem [thread:$0]  %s1, 128, %s41, [#allocation6]
    $region9: #{tpu_custom_call.1} parent=1 // pred_fallthru
      _
    // Predicated region
    $region10: #{tpu_custom_call.1} parent=1 // pred_check
      _
    $region11: #{tpu_custom_call.1} parent=1 // pred_check_branch
      %45 = sbr.rel (0) target = $region13
    $region12: #{tpu_custom_call.1} parent=1 // pred_region
      %s47 = ssub.s32 256, 256
      %48 = vsyncadd [#allocation6], %s47
      %s49 = sshll.u32 [#allocation7], 4
      %s50 = int_to_ptr.vmem [resolvable:$true] %s49
      %55 = dma.hbm_to_vmem [thread:$0]  %s2, 256, %s50, [#allocation6], 64, 64, 4
    $region13: #{tpu_custom_call.1} parent=1 // pred_fallthru
      _
    // Predicated region
    $region14: #{tpu_custom_call.1} parent=1 // pred_check
      _
    $region15: #{tpu_custom_call.1} parent=1 // pred_check_branch
      %57 = sbr.rel (0) target = $region17
    $region16: #{tpu_custom_call.1} parent=1 // pred_region
      %s59 = ssub.s32 256, 256
      %60 = vsyncadd [#allocation9], %s59
      %s61 = sshll.u32 [#allocation8], 4
      %s62 = int_to_ptr.vmem [resolvable:$true] %s61
      %67 = dma.hbm_to_vmem [thread:$0]  %s3, 256, %s62, [#allocation9], 64, 64, 4
    $region17: #{tpu_custom_call.1} parent=1 // pred_fallthru
      _
    // Predicated region
    $region18: #{tpu_custom_call.1} parent=1 // pred_check
      _
    $region19: #{tpu_custom_call.1} parent=1 // pred_check_branch
      %69 = sbr.rel (0) target = $region21
    $region20: #{tpu_custom_call.1} parent=1 // pred_region
      _
    $region21: #{tpu_custom_call.1} parent=1 // pred_fallthru
      _
    // Predicated region
    $region22: #{tpu_custom_call.1} parent=1 // pred_check
      _
    $region23: #{tpu_custom_call.1} parent=1 // pred_check_branch
      %71 = sbr.rel (0) target = $region25
    $region24: #{tpu_custom_call.1} parent=1 // pred_region
      %s73 = ssub.s32 1024, 1024
      %74 = vsyncadd [#allocation9], %s73
      %s75 = sshll.u32 [#allocation10], 4
      %s76 = int_to_ptr.vmem [resolvable:$true] %s75
      %81 = dma.hbm_to_vmem [thread:$0]  %s5, 1024, %s76, [#allocation9], 64, 64, 4
    $region25: #{tpu_custom_call.1} parent=1 // pred_fallthru
      _
    // Predicated region
    $region26: #{tpu_custom_call.1} parent=1 // pred_check
      _
    $region27: #{tpu_custom_call.1} parent=1 // pred_check_branch
      %83 = sbr.rel (0) target = $region29
    $region28: #{tpu_custom_call.1} parent=1 // pred_region
      _
    $region29: #{tpu_custom_call.1} parent=1 // pred_fallthru
      _
    // Predicated region
    $region30: #{tpu_custom_call.1} parent=1 // pred_check
      _
    $region31: #{tpu_custom_call.1} parent=1 // pred_check_branch
      %85 = sbr.rel (0) target = $region33
    $region32: #{tpu_custom_call.1} parent=1 // pred_region
      %s87 = ssub.s32 1024, 1024
      %88 = vsyncadd [#allocation12], %s87
      %s89 = sshll.u32 [#allocation11], 4
      %s90 = int_to_ptr.vmem [resolvable:$true] %s89
      %95 = dma.hbm_to_vmem [thread:$0]  %s7, 1024, %s90, [#allocation12], 64, 64, 4
    $region33: #{tpu_custom_call.1} parent=1 // pred_fallthru
      _
    // Predicated region
    $region34: #{tpu_custom_call.1} parent=1 // pred_check
      _
    $region35: #{tpu_custom_call.1} parent=1 // pred_check_branch
      %97 = sbr.rel (0) target = $region37
    $region36: #{tpu_custom_call.1} parent=1 // pred_region
      _
    $region37: #{tpu_custom_call.1} parent=1 // pred_fallthru
      _
    // Predicated region
    $region38: #{tpu_custom_call.1} parent=1 // pred_check
      _
    $region39: #{tpu_custom_call.1} parent=1 // pred_check_branch
      %99 = sbr.rel (0) target = $region41
    $region40: #{tpu_custom_call.1} parent=1 // pred_region
      %s101 = ssub.s32 1024, 1024
      %102 = vsyncadd [#allocation12], %s101
      %s103 = sshll.u32 [#allocation13], 4
      %s104 = int_to_ptr.vmem [resolvable:$true] %s103
      %109 = dma.hbm_to_vmem [thread:$0]  %s9, 1024, %s104, [#allocation12], 64, 64, 4
    $region41: #{tpu_custom_call.1} parent=1 // pred_fallthru
      _
    // Predicated region
    $region42: #{tpu_custom_call.1} parent=1 // pred_check
      _
    $region43: #{tpu_custom_call.1} parent=1 // pred_check_branch
      %111 = sbr.rel (0) target = $region45
    $region44: #{tpu_custom_call.1} parent=1 // pred_region
      _
    $region45: #{tpu_custom_call.1} parent=1 // pred_fallthru
      _
    // Predicated region
    $region46: #{tpu_custom_call.1} parent=1 // pred_check
      _
    $region47: #{tpu_custom_call.1} parent=1 // pred_check_branch
      %113 = sbr.rel (0) target = $region49
    $region48: #{tpu_custom_call.1} parent=1 // pred_region
      %s115 = ssub.s32 1024, 1024
      %116 = vsyncadd [#allocation15], %s115
      %s117 = sshll.u32 [#allocation14], 4
      %s118 = int_to_ptr.vmem [resolvable:$true] %s117
      %123 = dma.hbm_to_vmem [thread:$0]  %s11, 1024, %s118, [#allocation15], 64, 64, 4
    $region49: #{tpu_custom_call.1} parent=1 // pred_fallthru
      _
    // Predicated region
    $region50: #{tpu_custom_call.1} parent=1 // pred_check
      _
    $region51: #{tpu_custom_call.1} parent=1 // pred_check_branch
      %125 = sbr.rel (0) target = $region53
    $region52: #{tpu_custom_call.1} parent=1 // pred_region
      _
    $region53: #{tpu_custom_call.1} parent=1 // pred_fallthru
      _
    // Predicated region
    $region54: #{tpu_custom_call.1} parent=1 // pred_check
      _
    $region55: #{tpu_custom_call.1} parent=1 // pred_check_branch
      %127 = sbr.rel (0) target = $region57
    $region56: #{tpu_custom_call.1} parent=1 // pred_region
      %128 = dma.done [#allocation3], 128
    $region57: #{tpu_custom_call.1} parent=1 // pred_fallthru
      _
    // Predicated region
    $region58: #{tpu_custom_call.1} parent=1 // pred_check
      _
    $region59: #{tpu_custom_call.1} parent=1 // pred_check_branch
      %130 = sbr.rel (0) target = $region61
    $region60: #{tpu_custom_call.1} parent=1 // pred_region
      %131 = dma.done [#allocation6], 128
    $region61: #{tpu_custom_call.1} parent=1 // pred_fallthru
      _
    // Predicated region
    $region62: #{tpu_custom_call.1} parent=1 // pred_check
      _
    $region63: #{tpu_custom_call.1} parent=1 // pred_check_branch
      %133 = sbr.rel (0) target = $region65
    $region64: #{tpu_custom_call.1} parent=1 // pred_region
      %134 = dma.done [#allocation6], 256
    $region65: #{tpu_custom_call.1} parent=1 // pred_fallthru
      _
    // Predicated region
    $region66: #{tpu_custom_call.1} parent=1 // pred_check
      _
    $region67: #{tpu_custom_call.1} parent=1 // pred_check_branch
      %136 = sbr.rel (0) target = $region69
    $region68: #{tpu_custom_call.1} parent=1 // pred_region
      %137 = dma.done [#allocation9], 256
    $region69: #{tpu_custom_call.1} parent=1 // pred_fallthru
      _
    // Predicated region
    $region70: #{tpu_custom_call.1} parent=1 // pred_check
      _
    $region71: #{tpu_custom_call.1} parent=1 // pred_check_branch
      %139 = sbr.rel (0) target = $region73
    $region72: #{tpu_custom_call.1} parent=1 // pred_region
      %140 = dma.done [#allocation9], 1024
    $region73: #{tpu_custom_call.1} parent=1 // pred_fallthru
      _
    // Predicated region
    $region74: #{tpu_custom_call.1} parent=1 // pred_check
      _
    $region75: #{tpu_custom_call.1} parent=1 // pred_check_branch
      %142 = sbr.rel (0) target = $region77
    $region76: #{tpu_custom_call.1} parent=1 // pred_region
      %143 = dma.done [#allocation12], 1024
    $region77: #{tpu_custom_call.1} parent=1 // pred_fallthru
      _
    // Predicated region
    $region78: #{tpu_custom_call.1} parent=1 // pred_check
      _
    $region79: #{tpu_custom_call.1} parent=1 // pred_check_branch
      %145 = sbr.rel (0) target = $region81
    $region80: #{tpu_custom_call.1} parent=1 // pred_region
      %146 = dma.done [#allocation12], 1024
    $region81: #{tpu_custom_call.1} parent=1 // pred_fallthru
      _
    // Predicated region
    $region82: #{tpu_custom_call.1} parent=1 // pred_check
      _
    $region83: #{tpu_custom_call.1} parent=1 // pred_check_branch
      %148 = sbr.rel (0) target = $region85
    $region84: #{tpu_custom_call.1} parent=1 // pred_region
      %149 = dma.done [#allocation15], 1024
    $region85: #{tpu_custom_call.1} parent=1 // pred_fallthru
      _
    %v151 = vld [vmem:[#allocation7] sm:$0xf]
    %v152 = vld [vmem:[#allocation7 + $0x4] sm:$0xf]
    %v153 = vld [vmem:[#allocation7 + $0x8] sm:$0xf]
    %v154 = vld [vmem:[#allocation7 + $0xc] sm:$0xf]
    %v155 = vld [vmem:[#allocation8] sm:$0xf]
    %v156 = vld [vmem:[#allocation8 + $0x4] sm:$0xf]
    %v157 = vld [vmem:[#allocation8 + $0x8] sm:$0xf]
    %v158 = vld [vmem:[#allocation8 + $0xc] sm:$0xf]
    %v159 = vld [vmem:[%s4] sm:$0x1]
    %v160 = vld [vmem:[#allocation2] sm:$0xff]
    %v161 = vpack.c.bf16 %v160, %v160
    %v162 = vld [vmem:[#allocation5] sm:$0xff]
    %v163 = vpack.c.bf16 %v162, %v162
    %v168 = vunpack.c.l.b16 %v155
    %v169 = vunpack.c.l.b16 %v156
    %v170 = vunpack.c.l.b16 %v157
    %v171 = vunpack.c.l.b16 %v158
    %v172 = vpack.c.b16 %v169, %v168
    %v173 = vpack.c.b16 %v171, %v170
    %vm176 = vcmask 261120
    %v178 = vsel %vm176, %v163, 0
    %180 = vmatprep.subr.bf16.mxu0 0
    %181 = vmatpush1.bf16.msra.mxu0 %v172
    %182 = vmatprep.subr.bf16.mxu0 0
    %183 = vmatpush1.bf16.msra.mxu0 %v173
    %184 = vmatprep.subr.bf16.mxu0 0
    %185 = vmatpush1.bf16.msra.mxu0 0
    %186 = vmatprep.subr.bf16.mxu0 0
    %187 = vmatpush1.bf16.msra.mxu0 0
    %188 = vmatprep.subr.bf16.mxu0 0
    %189 = vmatpush1.bf16.msra.mxu0 0
    %190 = vmatprep.subr.bf16.mxu0 0
    %191 = vmatpush1.bf16.msra.mxu0 0
    %192 = vmatprep.subr.bf16.mxu0 0
    %193 = vmatpush1.bf16.msra.mxu0 0
    %194 = vmatprep.subr.bf16.mxu0 0
    %195 = vmatpush1.bf16.msra.mxu0 0
    %196 = vmatprep.subr.bf16.mxu0 0
    %197 = vmatpush1.bf16.msra.mxu0 0
    %198 = vmatprep.subr.bf16.mxu0 0
    %199 = vmatpush1.bf16.msra.mxu0 0
    %200 = vmatprep.subr.bf16.mxu0 0
    %201 = vmatpush1.bf16.msra.mxu0 0
    %202 = vmatprep.subr.bf16.mxu0 0
    %203 = vmatpush1.bf16.msra.mxu0 0
    %204 = vmatprep.subr.bf16.mxu0 0
    %205 = vmatpush1.bf16.msra.mxu0 0
    %206 = vmatprep.subr.bf16.mxu0 0
    %207 = vmatpush1.bf16.msra.mxu0 0
    %208 = vmatprep.subr.bf16.mxu0 0
    %209 = vmatpush1.bf16.msra.mxu0 0
    %210 = vmatprep.subr.bf16.mxu0 0
    %211 = vmatpush1.bf16.msra.mxu0 0
    %212 = vmatprep.mubr.bf16.mxu0 0
    %213 = vmatmul.mubr.bf16.gmra.mrb[0].mxu0 %v178
    %v214 = vpop.f32.mrb[0].mxu0
    %v215 = vadd.f32 0.0, %v214
    %v216 = vpop.f32.mrb[0].mxu0
    %v217 = vpop.f32.mrb[0].mxu0
    %v218 = vpop.f32.mrb[0].mxu0
    %219 = vdwg.mxu0
    %v224 = vunpack.c.l.b16 %v151
    %v225 = vunpack.c.l.b16 %v152
    %v226 = vunpack.c.l.b16 %v153
    %v227 = vunpack.c.l.b16 %v154
    %v228 = vpack.c.b16 %v225, %v224
    %v229 = vpack.c.b16 %v227, %v226
    %v233 = vsel %vm176, %v161, 0
    %235 = vmatprep.subr.bf16.mxu0 0
    %236 = vmatpush1.bf16.msra.mxu0 %v228
    %237 = vmatprep.subr.bf16.mxu0 0
    %238 = vmatpush1.bf16.msra.mxu0 %v229
    %239 = vmatprep.subr.bf16.mxu0 0
    %240 = vmatpush1.bf16.msra.mxu0 0
    %241 = vmatprep.subr.bf16.mxu0 0
    %242 = vmatpush1.bf16.msra.mxu0 0
    %243 = vmatprep.subr.bf16.mxu0 0
    %244 = vmatpush1.bf16.msra.mxu0 0
    %245 = vmatprep.subr.bf16.mxu0 0
    %246 = vmatpush1.bf16.msra.mxu0 0
    %247 = vmatprep.subr.bf16.mxu0 0
    %248 = vmatpush1.bf16.msra.mxu0 0
    %249 = vmatprep.subr.bf16.mxu0 0
    %250 = vmatpush1.bf16.msra.mxu0 0
    %251 = vmatprep.subr.bf16.mxu0 0
    %252 = vmatpush1.bf16.msra.mxu0 0
    %253 = vmatprep.subr.bf16.mxu0 0
    %254 = vmatpush1.bf16.msra.mxu0 0
    %255 = vmatprep.subr.bf16.mxu0 0
    %256 = vmatpush1.bf16.msra.mxu0 0
    %257 = vmatprep.subr.bf16.mxu0 0
    %258 = vmatpush1.bf16.msra.mxu0 0
    %259 = vmatprep.subr.bf16.mxu0 0
    %260 = vmatpush1.bf16.msra.mxu0 0
    %261 = vmatprep.subr.bf16.mxu0 0
    %262 = vmatpush1.bf16.msra.mxu0 0
    %263 = vmatprep.subr.bf16.mxu0 0
    %264 = vmatpush1.bf16.msra.mxu0 0
    %265 = vmatprep.subr.bf16.mxu0 0
    %266 = vmatpush1.bf16.msra.mxu0 0
    %267 = vmatprep.mubr.bf16.mxu0 0
    %268 = vmatmul.mubr.bf16.gmra.mrb[0].mxu0 %v233
    %v269 = vpop.f32.mrb[0].mxu0
    %v270 = vadd.f32 %v215, %v269
    %v271 = vpop.f32.mrb[0].mxu0
    %v272 = vpop.f32.mrb[0].mxu0
    %v273 = vpop.f32.mrb[0].mxu0
    %274 = vdwg.mxu0
    %v276 = vlaneseq
    %v277 = vshrl.u32 %v276, 7
    %v278 = vsub.s32 0, %v277
    %v279 = vrot.slane %v159, %v278
    %v281 = vadd.f32 %v270, %v279
    %v282 = vmax.f32 %v281, 0.0
    %v283 = vld [vmem:[#allocation10] sm:$0xf]
    %v284 = vld [vmem:[#allocation10 + $0x4] sm:$0xf]
    %v285 = vld [vmem:[#allocation10 + $0x8] sm:$0xf]
    %v286 = vld [vmem:[#allocation10 + $0xc] sm:$0xf]
    %v287 = vld [vmem:[#allocation10 + $0x10] sm:$0xf]
    %v288 = vld [vmem:[#allocation10 + $0x14] sm:$0xf]
    %v289 = vld [vmem:[#allocation10 + $0x18] sm:$0xf]
    %v290 = vld [vmem:[#allocation10 + $0x1c] sm:$0xf]
    %v291 = vld [vmem:[#allocation10 + $0x20] sm:$0xf]
    %v292 = vld [vmem:[#allocation10 + $0x24] sm:$0xf]
    %v293 = vld [vmem:[#allocation10 + $0x28] sm:$0xf]
    %v294 = vld [vmem:[#allocation10 + $0x2c] sm:$0xf]
    %v295 = vld [vmem:[#allocation10 + $0x30] sm:$0xf]
    %v296 = vld [vmem:[#allocation10 + $0x34] sm:$0xf]
    %v297 = vld [vmem:[#allocation10 + $0x38] sm:$0xf]
    %v298 = vld [vmem:[#allocation10 + $0x3c] sm:$0xf]
    %v299 = vld [vmem:[%s6] sm:$0x1]
    %v300 = vpack.c.bf16 %v282, %v282
    %v302 = vlaneseq
    %v303 = vshrl.u32 %v302, 7
    %v304 = vsub.s32 0, %v303
    %v305 = vrot.slane %v299, %v304
    %v323 = vunpack.c.l.b16 %v283
    %v324 = vunpack.c.l.b16 %v284
    %v325 = vunpack.c.l.b16 %v285
    %v326 = vunpack.c.l.b16 %v286
    %v327 = vunpack.c.l.b16 %v287
    %v328 = vunpack.c.l.b16 %v288
    %v329 = vunpack.c.l.b16 %v289
    %v330 = vunpack.c.l.b16 %v290
    %v331 = vunpack.c.l.b16 %v291
    %v332 = vunpack.c.l.b16 %v292
    %v333 = vunpack.c.l.b16 %v293
    %v334 = vunpack.c.l.b16 %v294
    %v335 = vunpack.c.l.b16 %v295
    %v336 = vunpack.c.l.b16 %v296
    %v337 = vunpack.c.l.b16 %v297
    %v338 = vunpack.c.l.b16 %v298
    %v339 = vpack.c.b16 %v324, %v323
    %v340 = vpack.c.b16 %v326, %v325
    %v341 = vpack.c.b16 %v328, %v327
    %v342 = vpack.c.b16 %v330, %v329
    %v343 = vpack.c.b16 %v332, %v331
    %v344 = vpack.c.b16 %v334, %v333
    %v345 = vpack.c.b16 %v336, %v335
    %v346 = vpack.c.b16 %v338, %v337
    %355 = vmatprep.subr.bf16.mxu0 0
    %356 = vmatpush1.bf16.msra.mxu0 %v339
    %357 = vmatprep.subr.bf16.mxu0 0
    %358 = vmatpush1.bf16.msra.mxu0 %v340
    %359 = vmatprep.subr.bf16.mxu0 0
    %360 = vmatpush1.bf16.msra.mxu0 %v341
    %361 = vmatprep.subr.bf16.mxu0 0
    %362 = vmatpush1.bf16.msra.mxu0 %v342
    %363 = vmatprep.subr.bf16.mxu0 0
    %364 = vmatpush1.bf16.msra.mxu0 %v343
    %365 = vmatprep.subr.bf16.mxu0 0
    %366 = vmatpush1.bf16.msra.mxu0 %v344
    %367 = vmatprep.subr.bf16.mxu0 0
    %368 = vmatpush1.bf16.msra.mxu0 %v345
    %369 = vmatprep.subr.bf16.mxu0 0
    %370 = vmatpush1.bf16.msra.mxu0 %v346
    %371 = vmatprep.subr.bf16.mxu0 0
    %372 = vmatpush1.bf16.msra.mxu0 0
    %373 = vmatprep.subr.bf16.mxu0 0
    %374 = vmatpush1.bf16.msra.mxu0 0
    %375 = vmatprep.subr.bf16.mxu0 0
    %376 = vmatpush1.bf16.msra.mxu0 0
    %377 = vmatprep.subr.bf16.mxu0 0
    %378 = vmatpush1.bf16.msra.mxu0 0
    %379 = vmatprep.subr.bf16.mxu0 0
    %380 = vmatpush1.bf16.msra.mxu0 0
    %381 = vmatprep.subr.bf16.mxu0 0
    %382 = vmatpush1.bf16.msra.mxu0 0
    %383 = vmatprep.subr.bf16.mxu0 0
    %384 = vmatpush1.bf16.msra.mxu0 0
    %385 = vmatprep.subr.bf16.mxu0 0
    %386 = vmatpush1.bf16.msra.mxu0 0
    %387 = vmatprep.mubr.bf16.mxu0 0
    %388 = vmatmul.mubr.bf16.gmra.mrb[0].mxu0 %v300
    %v389 = vpop.f32.mrb[0].mxu0
    %v390 = vadd.f32 %v305, %v389
    %v391 = vpop.f32.mrb[0].mxu0
    %v392 = vpop.f32.mrb[0].mxu0
    %v393 = vpop.f32.mrb[0].mxu0
    %394 = vdwg.mxu0
    %v395 = vld [vmem:[#allocation11] sm:$0xf]
    %v396 = vld [vmem:[#allocation11 + $0x4] sm:$0xf]
    %v397 = vld [vmem:[#allocation11 + $0x8] sm:$0xf]
    %v398 = vld [vmem:[#allocation11 + $0xc] sm:$0xf]
    %v399 = vld [vmem:[#allocation11 + $0x10] sm:$0xf]
    %v400 = vld [vmem:[#allocation11 + $0x14] sm:$0xf]
    %v401 = vld [vmem:[#allocation11 + $0x18] sm:$0xf]
    %v402 = vld [vmem:[#allocation11 + $0x1c] sm:$0xf]
    %v403 = vld [vmem:[#allocation11 + $0x20] sm:$0xf]
    %v404 = vld [vmem:[#allocation11 + $0x24] sm:$0xf]
    %v405 = vld [vmem:[#allocation11 + $0x28] sm:$0xf]
    %v406 = vld [vmem:[#allocation11 + $0x2c] sm:$0xf]
    %v407 = vld [vmem:[#allocation11 + $0x30] sm:$0xf]
    %v408 = vld [vmem:[#allocation11 + $0x34] sm:$0xf]
    %v409 = vld [vmem:[#allocation11 + $0x38] sm:$0xf]
    %v410 = vld [vmem:[#allocation11 + $0x3c] sm:$0xf]
    %v411 = vld [vmem:[%s8] sm:$0x1]
    %v412 = vpack.c.bf16 %v390, %v390
    %v414 = vlaneseq
    %v415 = vshrl.u32 %v414, 7
    %v416 = vsub.s32 0, %v415
    %v417 = vrot.slane %v411, %v416
    %v435 = vunpack.c.l.b16 %v395
    %v436 = vunpack.c.l.b16 %v396
    %v437 = vunpack.c.l.b16 %v397
    %v438 = vunpack.c.l.b16 %v398
    %v439 = vunpack.c.l.b16 %v399
    %v440 = vunpack.c.l.b16 %v400
    %v441 = vunpack.c.l.b16 %v401
    %v442 = vunpack.c.l.b16 %v402
    %v443 = vunpack.c.l.b16 %v403
    %v444 = vunpack.c.l.b16 %v404
    %v445 = vunpack.c.l.b16 %v405
    %v446 = vunpack.c.l.b16 %v406
    %v447 = vunpack.c.l.b16 %v407
    %v448 = vunpack.c.l.b16 %v408
    %v449 = vunpack.c.l.b16 %v409
    %v450 = vunpack.c.l.b16 %v410
    %v451 = vpack.c.b16 %v436, %v435
    %v452 = vpack.c.b16 %v438, %v437
    %v453 = vpack.c.b16 %v440, %v439
    %v454 = vpack.c.b16 %v442, %v441
    %v455 = vpack.c.b16 %v444, %v443
    %v456 = vpack.c.b16 %v446, %v445
    %v457 = vpack.c.b16 %v448, %v447
    %v458 = vpack.c.b16 %v450, %v449
    %467 = vmatprep.subr.bf16.mxu0 0
    %468 = vmatpush1.bf16.msra.mxu0 %v451
    %469 = vmatprep.subr.bf16.mxu0 0
    %470 = vmatpush1.bf16.msra.mxu0 %v452
    %471 = vmatprep.subr.bf16.mxu0 0
    %472 = vmatpush1.bf16.msra.mxu0 %v453
    %473 = vmatprep.subr.bf16.mxu0 0
    %474 = vmatpush1.bf16.msra.mxu0 %v454
    %475 = vmatprep.subr.bf16.mxu0 0
    %476 = vmatpush1.bf16.msra.mxu0 %v455
    %477 = vmatprep.subr.bf16.mxu0 0
    %478 = vmatpush1.bf16.msra.mxu0 %v456
    %479 = vmatprep.subr.bf16.mxu0 0
    %480 = vmatpush1.bf16.msra.mxu0 %v457
    %481 = vmatprep.subr.bf16.mxu0 0
    %482 = vmatpush1.bf16.msra.mxu0 %v458
    %483 = vmatprep.subr.bf16.mxu0 0
    %484 = vmatpush1.bf16.msra.mxu0 0
    %485 = vmatprep.subr.bf16.mxu0 0
    %486 = vmatpush1.bf16.msra.mxu0 0
    %487 = vmatprep.subr.bf16.mxu0 0
    %488 = vmatpush1.bf16.msra.mxu0 0
    %489 = vmatprep.subr.bf16.mxu0 0
    %490 = vmatpush1.bf16.msra.mxu0 0
    %491 = vmatprep.subr.bf16.mxu0 0
    %492 = vmatpush1.bf16.msra.mxu0 0
    %493 = vmatprep.subr.bf16.mxu0 0
    %494 = vmatpush1.bf16.msra.mxu0 0
    %495 = vmatprep.subr.bf16.mxu0 0
    %496 = vmatpush1.bf16.msra.mxu0 0
    %497 = vmatprep.subr.bf16.mxu0 0
    %498 = vmatpush1.bf16.msra.mxu0 0
    %499 = vmatprep.mubr.bf16.mxu0 0
    %500 = vmatmul.mubr.bf16.gmra.mrb[0].mxu0 %v412
    %v501 = vpop.f32.mrb[0].mxu0
    %v502 = vadd.f32 %v417, %v501
    %v503 = vpop.f32.mrb[0].mxu0
    %v504 = vpop.f32.mrb[0].mxu0
    %v505 = vpop.f32.mrb[0].mxu0
    %506 = vdwg.mxu0
    %v507 = vmax.f32 %v502, 0.0
    %v508 = vld [vmem:[#allocation13] sm:$0xf]
    %v509 = vld [vmem:[#allocation13 + $0x4] sm:$0xf]
    %v510 = vld [vmem:[#allocation13 + $0x8] sm:$0xf]
    %v511 = vld [vmem:[#allocation13 + $0xc] sm:$0xf]
    %v512 = vld [vmem:[#allocation13 + $0x10] sm:$0xf]
    %v513 = vld [vmem:[#allocation13 + $0x14] sm:$0xf]
    %v514 = vld [vmem:[#allocation13 + $0x18] sm:$0xf]
    %v515 = vld [vmem:[#allocation13 + $0x1c] sm:$0xf]
    %v516 = vld [vmem:[#allocation13 + $0x20] sm:$0xf]
    %v517 = vld [vmem:[#allocation13 + $0x24] sm:$0xf]
    %v518 = vld [vmem:[#allocation13 + $0x28] sm:$0xf]
    %v519 = vld [vmem:[#allocation13 + $0x2c] sm:$0xf]
    %v520 = vld [vmem:[#allocation13 + $0x30] sm:$0xf]
    %v521 = vld [vmem:[#allocation13 + $0x34] sm:$0xf]
    %v522 = vld [vmem:[#allocation13 + $0x38] sm:$0xf]
    %v523 = vld [vmem:[#allocation13 + $0x3c] sm:$0xf]
    %v524 = vld [vmem:[%s10] sm:$0x1]
    %v525 = vpack.c.bf16 %v507, %v507
    %v527 = vlaneseq
    %v528 = vshrl.u32 %v527, 7
    %v529 = vsub.s32 0, %v528
    %v530 = vrot.slane %v524, %v529
    %v548 = vunpack.c.l.b16 %v508
    %v549 = vunpack.c.l.b16 %v509
    %v550 = vunpack.c.l.b16 %v510
    %v551 = vunpack.c.l.b16 %v511
    %v552 = vunpack.c.l.b16 %v512
    %v553 = vunpack.c.l.b16 %v513
    %v554 = vunpack.c.l.b16 %v514
    %v555 = vunpack.c.l.b16 %v515
    %v556 = vunpack.c.l.b16 %v516
    %v557 = vunpack.c.l.b16 %v517
    %v558 = vunpack.c.l.b16 %v518
    %v559 = vunpack.c.l.b16 %v519
    %v560 = vunpack.c.l.b16 %v520
    %v561 = vunpack.c.l.b16 %v521
    %v562 = vunpack.c.l.b16 %v522
    %v563 = vunpack.c.l.b16 %v523
    %v564 = vpack.c.b16 %v549, %v548
    %v565 = vpack.c.b16 %v551, %v550
    %v566 = vpack.c.b16 %v553, %v552
    %v567 = vpack.c.b16 %v555, %v554
    %v568 = vpack.c.b16 %v557, %v556
    %v569 = vpack.c.b16 %v559, %v558
    %v570 = vpack.c.b16 %v561, %v560
    %v571 = vpack.c.b16 %v563, %v562
    %580 = vmatprep.subr.bf16.mxu0 0
    %581 = vmatpush1.bf16.msra.mxu0 %v564
    %582 = vmatprep.subr.bf16.mxu0 0
    %583 = vmatpush1.bf16.msra.mxu0 %v565
    %584 = vmatprep.subr.bf16.mxu0 0
    %585 = vmatpush1.bf16.msra.mxu0 %v566
    %586 = vmatprep.subr.bf16.mxu0 0
    %587 = vmatpush1.bf16.msra.mxu0 %v567
    %588 = vmatprep.subr.bf16.mxu0 0
    %589 = vmatpush1.bf16.msra.mxu0 %v568
    %590 = vmatprep.subr.bf16.mxu0 0
    %591 = vmatpush1.bf16.msra.mxu0 %v569
    %592 = vmatprep.subr.bf16.mxu0 0
    %593 = vmatpush1.bf16.msra.mxu0 %v570
    %594 = vmatprep.subr.bf16.mxu0 0
    %595 = vmatpush1.bf16.msra.mxu0 %v571
    %596 = vmatprep.subr.bf16.mxu0 0
    %597 = vmatpush1.bf16.msra.mxu0 0
    %598 = vmatprep.subr.bf16.mxu0 0
    %599 = vmatpush1.bf16.msra.mxu0 0
    %600 = vmatprep.subr.bf16.mxu0 0
    %601 = vmatpush1.bf16.msra.mxu0 0
    %602 = vmatprep.subr.bf16.mxu0 0
    %603 = vmatpush1.bf16.msra.mxu0 0
    %604 = vmatprep.subr.bf16.mxu0 0
    %605 = vmatpush1.bf16.msra.mxu0 0
    %606 = vmatprep.subr.bf16.mxu0 0
    %607 = vmatpush1.bf16.msra.mxu0 0
    %608 = vmatprep.subr.bf16.mxu0 0
    %609 = vmatpush1.bf16.msra.mxu0 0
    %610 = vmatprep.subr.bf16.mxu0 0
    %611 = vmatpush1.bf16.msra.mxu0 0
    %612 = vmatprep.mubr.bf16.mxu0 0
    %613 = vmatmul.mubr.bf16.gmra.mrb[0].mxu0 %v525
    %v614 = vpop.f32.mrb[0].mxu0
    %v615 = vadd.f32 %v530, %v614
    %v616 = vpop.f32.mrb[0].mxu0
    %v617 = vpop.f32.mrb[0].mxu0
    %v618 = vpop.f32.mrb[0].mxu0
    %619 = vdwg.mxu0
    %v620 = vld [vmem:[#allocation14] sm:$0xf]
    %v621 = vld [vmem:[#allocation14 + $0x4] sm:$0xf]
    %v622 = vld [vmem:[#allocation14 + $0x8] sm:$0xf]
    %v623 = vld [vmem:[#allocation14 + $0xc] sm:$0xf]
    %v624 = vld [vmem:[#allocation14 + $0x10] sm:$0xf]
    %v625 = vld [vmem:[#allocation14 + $0x14] sm:$0xf]
    %v626 = vld [vmem:[#allocation14 + $0x18] sm:$0xf]
    %v627 = vld [vmem:[#allocation14 + $0x1c] sm:$0xf]
    %v628 = vld [vmem:[#allocation14 + $0x20] sm:$0xf]
    %v629 = vld [vmem:[#allocation14 + $0x24] sm:$0xf]
    %v630 = vld [vmem:[#allocation14 + $0x28] sm:$0xf]
    %v631 = vld [vmem:[#allocation14 + $0x2c] sm:$0xf]
    %v632 = vld [vmem:[#allocation14 + $0x30] sm:$0xf]
    %v633 = vld [vmem:[#allocation14 + $0x34] sm:$0xf]
    %v634 = vld [vmem:[#allocation14 + $0x38] sm:$0xf]
    %v635 = vld [vmem:[#allocation14 + $0x3c] sm:$0xf]
    %v636 = vld [vmem:[%s12] sm:$0x1]
    %v637 = vpack.c.bf16 %v615, %v615
    %v639 = vlaneseq
    %v640 = vshrl.u32 %v639, 7
    %v641 = vsub.s32 0, %v640
    %v642 = vrot.slane %v636, %v641
    %v660 = vunpack.c.l.b16 %v620
    %v661 = vunpack.c.l.b16 %v621
    %v662 = vunpack.c.l.b16 %v622
    %v663 = vunpack.c.l.b16 %v623
    %v664 = vunpack.c.l.b16 %v624
    %v665 = vunpack.c.l.b16 %v625
    %v666 = vunpack.c.l.b16 %v626
    %v667 = vunpack.c.l.b16 %v627
    %v668 = vunpack.c.l.b16 %v628
    %v669 = vunpack.c.l.b16 %v629
    %v670 = vunpack.c.l.b16 %v630
    %v671 = vunpack.c.l.b16 %v631
    %v672 = vunpack.c.l.b16 %v632
    %v673 = vunpack.c.l.b16 %v633
    %v674 = vunpack.c.l.b16 %v634
    %v675 = vunpack.c.l.b16 %v635
    %v676 = vpack.c.b16 %v661, %v660
    %v677 = vpack.c.b16 %v663, %v662
    %v678 = vpack.c.b16 %v665, %v664
    %v679 = vpack.c.b16 %v667, %v666
    %v680 = vpack.c.b16 %v669, %v668
    %v681 = vpack.c.b16 %v671, %v670
    %v682 = vpack.c.b16 %v673, %v672
    %v683 = vpack.c.b16 %v675, %v674
    %692 = vmatprep.subr.bf16.mxu0 0
    %693 = vmatpush1.bf16.msra.mxu0 %v676
    %694 = vmatprep.subr.bf16.mxu0 0
    %695 = vmatpush1.bf16.msra.mxu0 %v677
    %696 = vmatprep.subr.bf16.mxu0 0
    %697 = vmatpush1.bf16.msra.mxu0 %v678
    %698 = vmatprep.subr.bf16.mxu0 0
    %699 = vmatpush1.bf16.msra.mxu0 %v679
    %700 = vmatprep.subr.bf16.mxu0 0
    %701 = vmatpush1.bf16.msra.mxu0 %v680
    %702 = vmatprep.subr.bf16.mxu0 0
    %703 = vmatpush1.bf16.msra.mxu0 %v681
    %704 = vmatprep.subr.bf16.mxu0 0
    %705 = vmatpush1.bf16.msra.mxu0 %v682
    %706 = vmatprep.subr.bf16.mxu0 0
    %707 = vmatpush1.bf16.msra.mxu0 %v683
    %708 = vmatprep.subr.bf16.mxu0 0
    %709 = vmatpush1.bf16.msra.mxu0 0
    %710 = vmatprep.subr.bf16.mxu0 0
    %711 = vmatpush1.bf16.msra.mxu0 0
    %712 = vmatprep.subr.bf16.mxu0 0
    %713 = vmatpush1.bf16.msra.mxu0 0
    %714 = vmatprep.subr.bf16.mxu0 0
    %715 = vmatpush1.bf16.msra.mxu0 0
    %716 = vmatprep.subr.bf16.mxu0 0
    %717 = vmatpush1.bf16.msra.mxu0 0
    %718 = vmatprep.subr.bf16.mxu0 0
    %719 = vmatpush1.bf16.msra.mxu0 0
    %720 = vmatprep.subr.bf16.mxu0 0
    %721 = vmatpush1.bf16.msra.mxu0 0
    %722 = vmatprep.subr.bf16.mxu0 0
    %723 = vmatpush1.bf16.msra.mxu0 0
    %724 = vmatprep.mubr.bf16.mxu0 0
    %725 = vmatmul.mubr.bf16.gmra.mrb[0].mxu0 %v637
    %v726 = vpop.f32.mrb[0].mxu0
    %v727 = vadd.f32 %v642, %v726
    %v728 = vpop.f32.mrb[0].mxu0
    %v729 = vpop.f32.mrb[0].mxu0
    %v730 = vpop.f32.mrb[0].mxu0
    %731 = vdwg.mxu0
    %732 = vst [vmem:[#allocation16] sm:$0xff] %v727
    // Predicated region
    $region86: #{tpu_custom_call.1} parent=1 // pred_check
      _
    $region87: #{tpu_custom_call.1} parent=1 // pred_check_branch
      %734 = sbr.rel (0) target = $region89
    $region88: #{tpu_custom_call.1} parent=1 // pred_region
      %s736 = ssub.s32 128, 128
      %737 = vsyncadd [#allocation4], %s736
      %s739 = sshll.u32 [#allocation16], 4
      %s740 = int_to_ptr.vmem [resolvable:$true] %s739
      %742 = dma.vmem_to_hbm [thread:$0]  %s740, 128, %s13, [#allocation4]
    $region89: #{tpu_custom_call.1} parent=1 // pred_fallthru
      _
    // Predicated region
    $region90: #{tpu_custom_call.1} parent=1 // pred_check
      _
    $region91: #{tpu_custom_call.1} parent=1 // pred_check_branch
      %744 = sbr.rel (0) target = $region93
    $region92: #{tpu_custom_call.1} parent=1 // pred_region
      %745 = dma.done [#allocation4], 128
    $region93: #{tpu_custom_call.1} parent=1 // pred_fallthru
      _
    %746 = vsyncpa [#allocation3], 1
    %747 = vsyncpa [#allocation6], 1
    %748 = vsyncpa [#allocation9], 1
    %749 = vsyncpa [#allocation12], 1
    %750 = vsyncpa [#allocation15], 1
    %751 = vsyncpa [#allocation4], 1

</llo_original>
